<compile_context>
chip_gen: v5e
topology: v5e:2x2
jax: 0.10.0
libtpu: 0.0.40
codegen_flags: <defaults>
</compile_context>

<pallas_src>
import functools

import jax
import jax.numpy as jnp
from jax.experimental import pallas as pl
from jax.experimental.pallas import tpu as pltpu

# ---------------- config (mirrors the PyTorch `params` dict) ----------------
INPUT_DIM = 16
LATENT_DIM = 3
WIDTHS = (32, 32)          # encoder widths; decoder uses reversed(WIDTHS)
POLY_ORDER = 2
INCLUDE_SINE = False
ACTIVATION = "sigmoid"     # only the 'sigmoid' branch of z_derivative is implemented
MODEL_ORDER = 1
N_TIME = 128               # number of time points (batch); lane-dense demo size
MAX_ROW_BLOCK = 4096       # batch tile cap when N scales (well inside v7x 64 MiB VMEM)

# TODO(synk): 'elu'/'relu'/'linear' activation branches of z_derivative, model_order==2
# (z_derivative_order2 / sindy_library_order2) and sequential_thresholding are not
# implemented in-kernel; only the configuration exercised here is.


def _library_dim(latent_dim, poly_order, include_sine):
    d = 1 + latent_dim
    if poly_order > 1:
        d += latent_dim * (latent_dim + 1) // 2
    if poly_order > 2:
        d += sum(1 for i in range(latent_dim) for j in range(i, latent_dim)
                 for _ in range(j, latent_dim))
    if include_sine:
        d += latent_dim
    return d


LIBRARY_DIM = _library_dim(LATENT_DIM, POLY_ORDER, INCLUDE_SINE)


def _round_up(v, m):
    return ((v + m - 1) // m) * m


def _choose_row_block(n):
    """Lane-axis tile size. Whole batch for small N; otherwise a 128-multiple block
    capped at MAX_ROW_BLOCK, chosen so the grid has >=2 steps (v7x megacore)."""
    if n <= 512:
        return n                      # single block; lane dim == full array dim (legal)
    half = _round_up(pl.cdiv(n, 2), 128)
    return min(MAX_ROW_BLOCK, half)


# ---------------------------------------------------------------------------
# fused kernel: encoder -> SINDy -> decoder (forward + first-order derivatives)
# ---------------------------------------------------------------------------
def full_network_kernel(*refs, n_enc, n_dec, latent_dim, input_dim,
                        poly_order, include_sine, row_block):
    n = row_block
    x_ref, dx_ref = refs[0], refs[1]
    idx = 2
    enc = tuple((refs[idx + 2 * i], refs[idx + 2 * i + 1]) for i in range(n_enc))
    idx += 2 * n_enc
    dec = tuple((refs[idx + 2 * i], refs[idx + 2 * i + 1]) for i in range(n_dec))
    idx += 2 * n_dec
    coeff_t_ref = refs[idx]           # (latent_dim, library_dim) = sindy_coefficients.T
    out_ref = refs[idx + 1]           # (3L + 2D, row_block) lane-dense output slab
    hd_ref = refs[idx + 2]            # (max_width, 2*row_block) scratch: [fwd | deriv]

    def run_mlp(layers):
        """Sigmoid MLP forward + z_derivative (sigmoid branch). The forward half
        (lanes [:n]) and the derivative half (lanes [n:]) share the same scratch and
        one MXU dot per layer (shared weight load)."""
        for w_ref, b_ref in layers[:-1]:
            w = w_ref[...]                                         # (out, in)
            out_dim, in_dim = w.shape
            prod = jax.lax.dot_general(                            # (out, 2n)
                w, hd_ref[0:in_dim, :], (((1,), (0,)), ((), ())),
                preferred_element_type=jnp.float32)
            s = jax.nn.sigmoid(prod[:, 0:n] + b_ref[...])          # forward half
            d = (s * (1.0 - s)) * prod[:, n:]                      # derivative half
            hd_ref[0:out_dim, 0:n] = s
            hd_ref[0:out_dim, n:] = d
        w_ref, b_ref = layers[-1]
        w = w_ref[...]
        in_dim = w.shape[1]
        prod = jax.lax.dot_general(
            w, hd_ref[0:in_dim, :], (((1,), (0,)), ((), ())),
            preferred_element_type=jnp.float32)
        return prod[:, 0:n] + b_ref[...], prod[:, n:]              # (out, n), (out, n)

    # ---- encoder: z = encoder(x), dz = z_derivative(x, dx) ----
    hd_ref[0:input_dim, 0:n] = x_ref[...]
    hd_ref[0:input_dim, n:] = dx_ref[...]
    z, dz = run_mlp(enc)                                           # (L, n) each
    out_ref[0:latent_dim, :] = z
    out_ref[latent_dim:2 * latent_dim, :] = dz

    # ---- SINDy: sindy_predict = Theta(z) @ C, pure VPU broadcast-MAC ----
    # No Theta materialization, no concat, no MXU dot on the encoder->decoder path.
    ct = coeff_t_ref[...]                                          # (L, library_dim)
    z_rows = [z[i:i + 1, :] for i in range(latent_dim)]
    sp = jnp.broadcast_to(ct[:, 0:1], (latent_dim, n))             # constant term
    k = 1
    for i in range(latent_dim):                                    # linear terms
        sp = sp + ct[:, k:k + 1] * z_rows[i]
        k += 1
    if poly_order > 1:                                             # z_i * z_j, j >= i
        for i in range(latent_dim):
            for j in range(i, latent_dim):
                sp = sp + ct[:, k:k + 1] * (z_rows[i] * z_rows[j])
                k += 1
    if poly_order > 2:                                             # cubic terms
        for i in range(latent_dim):
            for j in range(i, latent_dim):
                for m in range(j, latent_dim):
                    sp = sp + ct[:, k:k + 1] * (z_rows[i] * z_rows[j] * z_rows[m])
                    k += 1
    if include_sine:
        for i in range(latent_dim):
            sp = sp + ct[:, k:k + 1] * jnp.sin(z_rows[i])
            k += 1
    out_ref[2 * latent_dim:3 * latent_dim, :] = sp

    # ---- decoder: x_decode = decoder(z), dx_decode = z_derivative(z, sindy_predict) ----
    hd_ref[0:latent_dim, 0:n] = z
    hd_ref[0:latent_dim, n:] = sp
    x_decode, dx_decode = run_mlp(dec)
    out_ref[3 * latent_dim:3 * latent_dim + input_dim, :] = x_decode
    out_ref[3 * latent_dim + input_dim:, :] = dx_decode


# ---------------------------------------------------------------------------
# FullNetwork.forward (model_order == 1)
# returns (z, x_decode, dz, dx_decode, sindy_predict, x, dx, sindy_coefficients)
# ---------------------------------------------------------------------------
def full_network_forward(x, dx, enc_w, enc_b, dec_w, dec_b, sindy_coefficients):
    n, input_dim = x.shape
    latent_dim = sindy_coefficients.shape[1]
    out_width = 3 * latent_dim + 2 * input_dim    # [z | dz | sindy | x_dec | dx_dec] rows

    row_block = _choose_row_block(n)
    grid = (pl.cdiv(n, row_block),)

    # Lane-dense layout plumbing (wrapper-side transposes are cheap XLA ops).
    xt = x.T                                       # (D, N)
    dxt = dx.T                                     # (D, N)
    coeff_t = sindy_coefficients.T                 # (L, library_dim)

    params = []
    for w, b in zip(enc_w, enc_b):
        params += [w, b.reshape(-1, 1)]
    for w, b in zip(dec_w, dec_b):
        params += [w, b.reshape(-1, 1)]
    params.append(coeff_t)

    def _cols(i):        # batch-tiled arrays follow the grid along lanes
        return (0, i)

    def _resident(i):    # parameters stay resident across all grid steps
        return (0, 0)

    in_specs = [pl.BlockSpec((input_dim, row_block), _cols),
                pl.BlockSpec((input_dim, row_block), _cols)]
    in_specs += [pl.BlockSpec(p.shape, _resident) for p in params]
    out_specs = pl.BlockSpec((out_width, row_block), _cols)

    max_width = max([input_dim, latent_dim]
                    + [w.shape[0] for w in enc_w[:-1]]
                    + [w.shape[0] for w in dec_w[:-1]])
    scratch_shapes = [pltpu.VMEM((max_width, 2 * row_block), jnp.float32)]

    # advisory cost estimate so XLA schedules sensibly around the custom call
    flops = sum(2 * (2 * n) * int(w.shape[0]) * int(w.shape[1])
                for w in list(enc_w) + list(dec_w))
    flops += 2 * n * int(sindy_coefficients.shape[0]) * latent_dim
    transcendentals = n * (sum(int(w.shape[0]) for w in enc_w[:-1])
                           + sum(int(w.shape[0]) for w in dec_w[:-1]))
    param_bytes = sum(int(p.size) * 4 for p in params)
    bytes_accessed = 4 * n * (2 * input_dim + out_width) + param_bytes
    cost = pl.CostEstimate(flops=int(flops), transcendentals=int(transcendentals),
                           bytes_accessed=int(bytes_accessed))

    kernel = functools.partial(
        full_network_kernel,
        n_enc=len(enc_w), n_dec=len(dec_w),
        latent_dim=latent_dim, input_dim=input_dim,
        poly_order=POLY_ORDER, include_sine=INCLUDE_SINE,
        row_block=row_block)

    out = pl.pallas_call(
        kernel,
        out_shape=jax.ShapeDtypeStruct((out_width, n), jnp.float32),
        grid=grid,
        in_specs=in_specs,
        out_specs=out_specs,
        scratch_shapes=scratch_shapes,
        compiler_params=pltpu.CompilerParams(
            dimension_semantics=("parallel",)),   # shards batch blocks over v7x's 2 TCs
        cost_estimate=cost,
    )(xt, dxt, *params)

    L, D = latent_dim, input_dim
    z = out[0:L, :].T
    dz = out[L:2 * L, :].T
    sindy_predict = out[2 * L:3 * L, :].T
    x_decode = out[3 * L:3 * L + D, :].T
    dx_decode = out[3 * L + D:, :].T
    return (z, x_decode, dz, dx_decode, sindy_predict, x, dx, sindy_coefficients)


# ---------------------------------------------------------------------------
# Pure-JAX reference (mirrors the PyTorch code exactly) for a correctness check.
# ---------------------------------------------------------------------------
def _ref_mlp_and_deriv(inp, d, weights, biases):
    h, dd = inp, d
    for w, b in zip(weights[:-1], biases[:-1]):
        a = h @ w.T + b
        s = jax.nn.sigmoid(a)
        dd = s * (1.0 - s) * (dd @ w.T)
        h = s
    return h @ weights[-1].T + biases[-1], dd @ weights[-1].T


def _ref_sindy_library(z):
    n = z.shape[0]
    cols = [jnp.ones((n,), jnp.float32)]
    for i in range(LATENT_DIM):
        cols.append(z[:, i])
    if POLY_ORDER > 1:
        for i in range(LATENT_DIM):
            for j in range(i, LATENT_DIM):
                cols.append(z[:, i] * z[:, j])
    if POLY_ORDER > 2:
        for i in range(LATENT_DIM):
            for j in range(i, LATENT_DIM):
                for k in range(j, LATENT_DIM):
                    cols.append(z[:, i] * z[:, j] * z[:, k])
    if INCLUDE_SINE:
        for i in range(LATENT_DIM):
            cols.append(jnp.sin(z[:, i]))
    return jnp.stack(cols, axis=1)


def _ref_forward(x, dx, enc_w, enc_b, dec_w, dec_b, coeffs):
    z, dz = _ref_mlp_and_deriv(x, dx, enc_w, enc_b)
    theta = _ref_sindy_library(z)
    sindy_predict = theta @ coeffs
    x_decode, dx_decode = _ref_mlp_and_deriv(z, sindy_predict, dec_w, dec_b)
    return z, x_decode, dz, dx_decode, sindy_predict


# ---------------------------------------------------------------------------
def _init_linear(key, in_dim, out_dim):
    kw, kb = jax.random.split(key)
    w = 0.2 * jax.random.normal(kw, (out_dim, in_dim), jnp.float32)
    b = 0.1 * jax.random.normal(kb, (out_dim,), jnp.float32)
    return w, b


def _build_mlp_params(key, in_dim, widths, out_dim):
    ws, bs = [], []
    d = in_dim
    for w_dim in widths:
        key, k = jax.random.split(key)
        w, b = _init_linear(k, d, w_dim)
        ws.append(w); bs.append(b)
        d = w_dim
    key, k = jax.random.split(key)
    w, b = _init_linear(k, d, out_dim)
    ws.append(w); bs.append(b)
    return ws, bs


if __name__ == "__main__":
    key = jax.random.PRNGKey(0)
    k_enc, k_dec, k_coef, k_x, k_dx = jax.random.split(key, 5)

    enc_w, enc_b = _build_mlp_params(k_enc, INPUT_DIM, WIDTHS, LATENT_DIM)
    dec_w, dec_b = _build_mlp_params(k_dec, LATENT_DIM, tuple(reversed(WIDTHS)), INPUT_DIM)
    # coefficient_initialization == 'normal'
    sindy_coefficients = jax.random.normal(k_coef, (LIBRARY_DIM, LATENT_DIM), jnp.float32)

    x = jax.random.normal(k_x, (N_TIME, INPUT_DIM), jnp.float32)
    dx = jax.random.normal(k_dx, (N_TIME, INPUT_DIM), jnp.float32)

    fwd = jax.jit(full_network_forward)
    out = fwd(x, dx, enc_w, enc_b, dec_w, dec_b, sindy_coefficients)
    out = jax.block_until_ready(out)
    z, x_decode, dz, dx_decode, sindy_predict, _, _, _ = out

    # correctness check vs. pure-JAX reference of the PyTorch semantics
    rz, rxd, rdz, rdxd, rsp = _ref_forward(
        x, dx, enc_w, enc_b, dec_w, dec_b, sindy_coefficients)
    for got, want in ((z, rz), (x_decode, rxd), (dz, rdz),
                      (dx_decode, rdxd), (sindy_predict, rsp)):
        assert got.shape == want.shape, "shape mismatch vs reference"
        assert jnp.allclose(got, want, atol=1e-4, rtol=1e-4), "mismatch vs reference"

    print("KERNEL_OK")
</pallas_src>

<mosaic_0001>
module attributes {stable_mosaic.version = 11 : i64} {
  func.func @full_network_kernel(%arg0: i32, %arg1: memref<16x128xf32, #tpu.memory_space<vmem>>, %arg2: memref<16x128xf32, #tpu.memory_space<vmem>>, %arg3: memref<32x16xf32, #tpu.memory_space<vmem>>, %arg4: memref<32x1xf32, #tpu.memory_space<vmem>>, %arg5: memref<32x32xf32, #tpu.memory_space<vmem>>, %arg6: memref<32x1xf32, #tpu.memory_space<vmem>>, %arg7: memref<3x32xf32, #tpu.memory_space<vmem>>, %arg8: memref<3x1xf32, #tpu.memory_space<vmem>>, %arg9: memref<32x3xf32, #tpu.memory_space<vmem>>, %arg10: memref<32x1xf32, #tpu.memory_space<vmem>>, %arg11: memref<32x32xf32, #tpu.memory_space<vmem>>, %arg12: memref<32x1xf32, #tpu.memory_space<vmem>>, %arg13: memref<16x32xf32, #tpu.memory_space<vmem>>, %arg14: memref<16x1xf32, #tpu.memory_space<vmem>>, %arg15: memref<3x10xf32, #tpu.memory_space<vmem>>, %arg16: memref<41x128xf32, #tpu.memory_space<vmem>>, %arg17: memref<32x256xf32, #tpu.memory_space<vmem>>) attributes {dimension_semantics = [#tpu.dimension_semantics<parallel>], iteration_bounds = array<i64: 1>, scalar_prefetch = 0 : i64, scratch_operands = 1 : i64, tpu.core_type = #tpu.core_type<tc>, window_params = [{transform_indices = @transform_0, window_bounds = array<i64: 16, 128>}, {transform_indices = @transform_1, window_bounds = array<i64: 16, 128>}, {pipeline_mode = #tpu.pipeline_mode<synchronous>, transform_indices = @transform_2, window_bounds = array<i64: 32, 16>}, {pipeline_mode = #tpu.pipeline_mode<synchronous>, transform_indices = @transform_3, window_bounds = array<i64: 32, 1>}, {pipeline_mode = #tpu.pipeline_mode<synchronous>, transform_indices = @transform_4, window_bounds = array<i64: 32, 32>}, {pipeline_mode = #tpu.pipeline_mode<synchronous>, transform_indices = @transform_5, window_bounds = array<i64: 32, 1>}, {pipeline_mode = #tpu.pipeline_mode<synchronous>, transform_indices = @transform_6, window_bounds = array<i64: 3, 32>}, {pipeline_mode = #tpu.pipeline_mode<synchronous>, transform_indices = @transform_7, window_bounds = array<i64: 3, 1>}, {pipeline_mode = #tpu.pipeline_mode<synchronous>, transform_indices = @transform_8, window_bounds = array<i64: 32, 3>}, {pipeline_mode = #tpu.pipeline_mode<synchronous>, transform_indices = @transform_9, window_bounds = array<i64: 32, 1>}, {pipeline_mode = #tpu.pipeline_mode<synchronous>, transform_indices = @transform_10, window_bounds = array<i64: 32, 32>}, {pipeline_mode = #tpu.pipeline_mode<synchronous>, transform_indices = @transform_11, window_bounds = array<i64: 32, 1>}, {pipeline_mode = #tpu.pipeline_mode<synchronous>, transform_indices = @transform_12, window_bounds = array<i64: 16, 32>}, {pipeline_mode = #tpu.pipeline_mode<synchronous>, transform_indices = @transform_13, window_bounds = array<i64: 16, 1>}, {pipeline_mode = #tpu.pipeline_mode<synchronous>, transform_indices = @transform_14, window_bounds = array<i64: 3, 10>}, {transform_indices = @transform_15, window_bounds = array<i64: 41, 128>}]} {
    %c0 = arith.constant 0 : index
    %c0_0 = arith.constant 0 : index
    %0 = vector.load %arg1[%c0, %c0_0] : memref<16x128xf32, #tpu.memory_space<vmem>>, vector<16x128xf32>
    %c0_1 = arith.constant 0 : index
    %c0_2 = arith.constant 0 : index
    %1 = vector.load %arg17[%c0_1, %c0_2] : memref<32x256xf32, #tpu.memory_space<vmem>>, vector<16x128xf32>
    tpu.vector_store %arg17[%c0_1, %c0_2], %0 {strides = array<i32>} : memref<32x256xf32, #tpu.memory_space<vmem>>, vector<16x128xf32>,
    %c0_3 = arith.constant 0 : index
    %c0_4 = arith.constant 0 : index
    %2 = vector.load %arg2[%c0_3, %c0_4] : memref<16x128xf32, #tpu.memory_space<vmem>>, vector<16x128xf32>
    %c0_5 = arith.constant 0 : index
    %c128 = arith.constant 128 : index
    %3 = vector.load %arg17[%c0_5, %c128] : memref<32x256xf32, #tpu.memory_space<vmem>>, vector<16x128xf32>
    tpu.vector_store %arg17[%c0_5, %c128], %2 {strides = array<i32>} : memref<32x256xf32, #tpu.memory_space<vmem>>, vector<16x128xf32>,
    %c0_6 = arith.constant 0 : index
    %c0_7 = arith.constant 0 : index
    %4 = vector.load %arg3[%c0_6, %c0_7] : memref<32x16xf32, #tpu.memory_space<vmem>>, vector<32x16xf32>
    %c0_8 = arith.constant 0 : index
    %c0_9 = arith.constant 0 : index
    %5 = vector.load %arg17[%c0_8, %c0_9] : memref<32x256xf32, #tpu.memory_space<vmem>>, vector<16x256xf32>
    %cst = arith.constant dense<0.000000e+00> : vector<32x256xf32>
    %6 = tpu.matmul %4, %5, %cst {dimension_numbers = #tpu.dot_dimension_numbers<[1], [0], [0], [1], [0, 0, 1, 1], [], []>} : vector<32x16xf32>, vector<16x256xf32>, vector<32x256xf32> -> vector<32x256xf32>
    %7 = vector.extract_strided_slice %6 {offsets = [0, 0], sizes = [32, 128], strides = [1, 1]} : vector<32x256xf32> to vector<32x128xf32>
    %c0_10 = arith.constant 0 : index
    %c0_11 = arith.constant 0 : index
    %8 = vector.load %arg4[%c0_10, %c0_11] : memref<32x1xf32, #tpu.memory_space<vmem>>, vector<32x1xf32>
    %9 = vector.broadcast %8 : vector<32x1xf32> to vector<32x128xf32>
    %10 = arith.addf %7, %9 : vector<32x128xf32>
    %11 = arith.negf %10 : vector<32x128xf32>
    %12 = math.exp %11 : vector<32x128xf32>
    %cst_12 = arith.constant 1.000000e+00 : f32
    %13 = vector.broadcast %cst_12 : f32 to vector<32x128xf32>
    %14 = arith.addf %13, %12 : vector<32x128xf32>
    %15 = arith.divf %13, %14 : vector<32x128xf32>
    %cst_13 = arith.constant 1.000000e+00 : f32
    %16 = vector.broadcast %cst_13 : f32 to vector<32x128xf32>
    %17 = arith.subf %16, %15 : vector<32x128xf32>
    %18 = arith.mulf %15, %17 : vector<32x128xf32>
    %19 = vector.extract_strided_slice %6 {offsets = [0, 128], sizes = [32, 128], strides = [1, 1]} : vector<32x256xf32> to vector<32x128xf32>
    %20 = arith.mulf %18, %19 : vector<32x128xf32>
    %c0_14 = arith.constant 0 : index
    %c0_15 = arith.constant 0 : index
    %21 = vector.load %arg17[%c0_14, %c0_15] : memref<32x256xf32, #tpu.memory_space<vmem>>, vector<32x128xf32>
    tpu.vector_store %arg17[%c0_14, %c0_15], %15 {strides = array<i32>} : memref<32x256xf32, #tpu.memory_space<vmem>>, vector<32x128xf32>,
    %c0_16 = arith.constant 0 : index
    %c128_17 = arith.constant 128 : index
    %22 = vector.load %arg17[%c0_16, %c128_17] : memref<32x256xf32, #tpu.memory_space<vmem>>, vector<32x128xf32>
    tpu.vector_store %arg17[%c0_16, %c128_17], %20 {strides = array<i32>} : memref<32x256xf32, #tpu.memory_space<vmem>>, vector<32x128xf32>,
    %c0_18 = arith.constant 0 : index
    %c0_19 = arith.constant 0 : index
    %23 = vector.load %arg5[%c0_18, %c0_19] : memref<32x32xf32, #tpu.memory_space<vmem>>, vector<32x32xf32>
    %c0_20 = arith.constant 0 : index
    %c0_21 = arith.constant 0 : index
    %24 = vector.load %arg17[%c0_20, %c0_21] : memref<32x256xf32, #tpu.memory_space<vmem>>, vector<32x256xf32>
    %cst_22 = arith.constant dense<0.000000e+00> : vector<32x256xf32>
    %25 = tpu.matmul %23, %24, %cst_22 {dimension_numbers = #tpu.dot_dimension_numbers<[1], [0], [0], [1], [0, 0, 1, 1], [], []>} : vector<32x32xf32>, vector<32x256xf32>, vector<32x256xf32> -> vector<32x256xf32>
    %26 = vector.extract_strided_slice %25 {offsets = [0, 0], sizes = [32, 128], strides = [1, 1]} : vector<32x256xf32> to vector<32x128xf32>
    %c0_23 = arith.constant 0 : index
    %c0_24 = arith.constant 0 : index
    %27 = vector.load %arg6[%c0_23, %c0_24] : memref<32x1xf32, #tpu.memory_space<vmem>>, vector<32x1xf32>
    %28 = vector.broadcast %27 : vector<32x1xf32> to vector<32x128xf32>
    %29 = arith.addf %26, %28 : vector<32x128xf32>
    %30 = arith.negf %29 : vector<32x128xf32>
    %31 = math.exp %30 : vector<32x128xf32>
    %cst_25 = arith.constant 1.000000e+00 : f32
    %32 = vector.broadcast %cst_25 : f32 to vector<32x128xf32>
    %33 = arith.addf %32, %31 : vector<32x128xf32>
    %34 = arith.divf %32, %33 : vector<32x128xf32>
    %cst_26 = arith.constant 1.000000e+00 : f32
    %35 = vector.broadcast %cst_26 : f32 to vector<32x128xf32>
    %36 = arith.subf %35, %34 : vector<32x128xf32>
    %37 = arith.mulf %34, %36 : vector<32x128xf32>
    %38 = vector.extract_strided_slice %25 {offsets = [0, 128], sizes = [32, 128], strides = [1, 1]} : vector<32x256xf32> to vector<32x128xf32>
    %39 = arith.mulf %37, %38 : vector<32x128xf32>
    %c0_27 = arith.constant 0 : index
    %c0_28 = arith.constant 0 : index
    %40 = vector.load %arg17[%c0_27, %c0_28] : memref<32x256xf32, #tpu.memory_space<vmem>>, vector<32x128xf32>
    tpu.vector_store %arg17[%c0_27, %c0_28], %34 {strides = array<i32>} : memref<32x256xf32, #tpu.memory_space<vmem>>, vector<32x128xf32>,
    %c0_29 = arith.constant 0 : index
    %c128_30 = arith.constant 128 : index
    %41 = vector.load %arg17[%c0_29, %c128_30] : memref<32x256xf32, #tpu.memory_space<vmem>>, vector<32x128xf32>
    tpu.vector_store %arg17[%c0_29, %c128_30], %39 {strides = array<i32>} : memref<32x256xf32, #tpu.memory_space<vmem>>, vector<32x128xf32>,
    %c0_31 = arith.constant 0 : index
    %c0_32 = arith.constant 0 : index
    %42 = vector.load %arg7[%c0_31, %c0_32] : memref<3x32xf32, #tpu.memory_space<vmem>>, vector<3x32xf32>
    %c0_33 = arith.constant 0 : index
    %c0_34 = arith.constant 0 : index
    %43 = vector.load %arg17[%c0_33, %c0_34] : memref<32x256xf32, #tpu.memory_space<vmem>>, vector<32x256xf32>
    %cst_35 = arith.constant dense<0.000000e+00> : vector<3x256xf32>
    %44 = tpu.matmul %42, %43, %cst_35 {dimension_numbers = #tpu.dot_dimension_numbers<[1], [0], [0], [1], [0, 0, 1, 1], [], []>} : vector<3x32xf32>, vector<32x256xf32>, vector<3x256xf32> -> vector<3x256xf32>
    %45 = vector.extract_strided_slice %44 {offsets = [0, 0], sizes = [3, 128], strides = [1, 1]} : vector<3x256xf32> to vector<3x128xf32>
    %c0_36 = arith.constant 0 : index
    %c0_37 = arith.constant 0 : index
    %46 = vector.load %arg8[%c0_36, %c0_37] : memref<3x1xf32, #tpu.memory_space<vmem>>, vector<3x1xf32>
    %47 = vector.broadcast %46 : vector<3x1xf32> to vector<3x128xf32>
    %48 = arith.addf %45, %47 : vector<3x128xf32>
    %49 = vector.extract_strided_slice %44 {offsets = [0, 128], sizes = [3, 128], strides = [1, 1]} : vector<3x256xf32> to vector<3x128xf32>
    %c0_38 = arith.constant 0 : index
    %c0_39 = arith.constant 0 : index
    %50 = vector.load %arg16[%c0_38, %c0_39] : memref<41x128xf32, #tpu.memory_space<vmem>>, vector<3x128xf32>
    tpu.vector_store %arg16[%c0_38, %c0_39], %48 {strides = array<i32>} : memref<41x128xf32, #tpu.memory_space<vmem>>, vector<3x128xf32>,
    %c3 = arith.constant 3 : index
    %c0_40 = arith.constant 0 : index
    %51 = vector.load %arg16[%c3, %c0_40] : memref<41x128xf32, #tpu.memory_space<vmem>>, vector<3x128xf32>
    tpu.vector_store %arg16[%c3, %c0_40], %49 {strides = array<i32>} : memref<41x128xf32, #tpu.memory_space<vmem>>, vector<3x128xf32>,
    %c0_41 = arith.constant 0 : index
    %c0_42 = arith.constant 0 : index
    %52 = vector.load %arg15[%c0_41, %c0_42] : memref<3x10xf32, #tpu.memory_space<vmem>>, vector<3x10xf32>
    %53 = vector.extract_strided_slice %48 {offsets = [0, 0], sizes = [1, 128], strides = [1, 1]} : vector<3x128xf32> to vector<1x128xf32>
    %54 = vector.extract_strided_slice %48 {offsets = [1, 0], sizes = [1, 128], strides = [1, 1]} : vector<3x128xf32> to vector<1x128xf32>
    %55 = vector.extract_strided_slice %48 {offsets = [2, 0], sizes = [1, 128], strides = [1, 1]} : vector<3x128xf32> to vector<1x128xf32>
    %56 = vector.extract_strided_slice %52 {offsets = [0, 0], sizes = [3, 1], strides = [1, 1]} : vector<3x10xf32> to vector<3x1xf32>
    %57 = vector.shape_cast %56 : vector<3x1xf32> to vector<3x1xf32>
    %58 = vector.broadcast %57 : vector<3x1xf32> to vector<3x128xf32>
    %59 = vector.extract_strided_slice %52 {offsets = [0, 1], sizes = [3, 1], strides = [1, 1]} : vector<3x10xf32> to vector<3x1xf32>
    %60 = vector.broadcast %59 : vector<3x1xf32> to vector<3x128xf32>
    %61 = vector.broadcast %53 : vector<1x128xf32> to vector<3x128xf32>
    %62 = arith.mulf %60, %61 : vector<3x128xf32>
    %63 = arith.addf %58, %62 : vector<3x128xf32>
    %64 = vector.extract_strided_slice %52 {offsets = [0, 2], sizes = [3, 1], strides = [1, 1]} : vector<3x10xf32> to vector<3x1xf32>
    %65 = vector.broadcast %64 : vector<3x1xf32> to vector<3x128xf32>
    %66 = vector.broadcast %54 : vector<1x128xf32> to vector<3x128xf32>
    %67 = arith.mulf %65, %66 : vector<3x128xf32>
    %68 = arith.addf %63, %67 : vector<3x128xf32>
    %69 = vector.extract_strided_slice %52 {offsets = [0, 3], sizes = [3, 1], strides = [1, 1]} : vector<3x10xf32> to vector<3x1xf32>
    %70 = vector.broadcast %69 : vector<3x1xf32> to vector<3x128xf32>
    %71 = vector.broadcast %55 : vector<1x128xf32> to vector<3x128xf32>
    %72 = arith.mulf %70, %71 : vector<3x128xf32>
    %73 = arith.addf %68, %72 : vector<3x128xf32>
    %74 = vector.extract_strided_slice %52 {offsets = [0, 4], sizes = [3, 1], strides = [1, 1]} : vector<3x10xf32> to vector<3x1xf32>
    %75 = arith.mulf %53, %53 : vector<1x128xf32>
    %76 = vector.broadcast %74 : vector<3x1xf32> to vector<3x128xf32>
    %77 = vector.broadcast %75 : vector<1x128xf32> to vector<3x128xf32>
    %78 = arith.mulf %76, %77 : vector<3x128xf32>
    %79 = arith.addf %73, %78 : vector<3x128xf32>
    %80 = vector.extract_strided_slice %52 {offsets = [0, 5], sizes = [3, 1], strides = [1, 1]} : vector<3x10xf32> to vector<3x1xf32>
    %81 = arith.mulf %53, %54 : vector<1x128xf32>
    %82 = vector.broadcast %80 : vector<3x1xf32> to vector<3x128xf32>
    %83 = vector.broadcast %81 : vector<1x128xf32> to vector<3x128xf32>
    %84 = arith.mulf %82, %83 : vector<3x128xf32>
    %85 = arith.addf %79, %84 : vector<3x128xf32>
    %86 = vector.extract_strided_slice %52 {offsets = [0, 6], sizes = [3, 1], strides = [1, 1]} : vector<3x10xf32> to vector<3x1xf32>
    %87 = arith.mulf %53, %55 : vector<1x128xf32>
    %88 = vector.broadcast %86 : vector<3x1xf32> to vector<3x128xf32>
    %89 = vector.broadcast %87 : vector<1x128xf32> to vector<3x128xf32>
    %90 = arith.mulf %88, %89 : vector<3x128xf32>
    %91 = arith.addf %85, %90 : vector<3x128xf32>
    %92 = vector.extract_strided_slice %52 {offsets = [0, 7], sizes = [3, 1], strides = [1, 1]} : vector<3x10xf32> to vector<3x1xf32>
    %93 = arith.mulf %54, %54 : vector<1x128xf32>
    %94 = vector.broadcast %92 : vector<3x1xf32> to vector<3x128xf32>
    %95 = vector.broadcast %93 : vector<1x128xf32> to vector<3x128xf32>
    %96 = arith.mulf %94, %95 : vector<3x128xf32>
    %97 = arith.addf %91, %96 : vector<3x128xf32>
    %98 = vector.extract_strided_slice %52 {offsets = [0, 8], sizes = [3, 1], strides = [1, 1]} : vector<3x10xf32> to vector<3x1xf32>
    %99 = arith.mulf %54, %55 : vector<1x128xf32>
    %100 = vector.broadcast %98 : vector<3x1xf32> to vector<3x128xf32>
    %101 = vector.broadcast %99 : vector<1x128xf32> to vector<3x128xf32>
    %102 = arith.mulf %100, %101 : vector<3x128xf32>
    %103 = arith.addf %97, %102 : vector<3x128xf32>
    %104 = vector.extract_strided_slice %52 {offsets = [0, 9], sizes = [3, 1], strides = [1, 1]} : vector<3x10xf32> to vector<3x1xf32>
    %105 = arith.mulf %55, %55 : vector<1x128xf32>
    %106 = vector.broadcast %104 : vector<3x1xf32> to vector<3x128xf32>
    %107 = vector.broadcast %105 : vector<1x128xf32> to vector<3x128xf32>
    %108 = arith.mulf %106, %107 : vector<3x128xf32>
    %109 = arith.addf %103, %108 : vector<3x128xf32>
    %c6 = arith.constant 6 : index
    %c0_43 = arith.constant 0 : index
    %110 = vector.load %arg16[%c6, %c0_43] : memref<41x128xf32, #tpu.memory_space<vmem>>, vector<3x128xf32>
    tpu.vector_store %arg16[%c6, %c0_43], %109 {strides = array<i32>} : memref<41x128xf32, #tpu.memory_space<vmem>>, vector<3x128xf32>,
    %c0_44 = arith.constant 0 : index
    %c0_45 = arith.constant 0 : index
    %111 = vector.load %arg17[%c0_44, %c0_45] : memref<32x256xf32, #tpu.memory_space<vmem>>, vector<3x128xf32>
    tpu.vector_store %arg17[%c0_44, %c0_45], %48 {strides = array<i32>} : memref<32x256xf32, #tpu.memory_space<vmem>>, vector<3x128xf32>,
    %c0_46 = arith.constant 0 : index
    %c128_47 = arith.constant 128 : index
    %112 = vector.load %arg17[%c0_46, %c128_47] : memref<32x256xf32, #tpu.memory_space<vmem>>, vector<3x128xf32>
    tpu.vector_store %arg17[%c0_46, %c128_47], %109 {strides = array<i32>} : memref<32x256xf32, #tpu.memory_space<vmem>>, vector<3x128xf32>,
    %c0_48 = arith.constant 0 : index
    %c0_49 = arith.constant 0 : index
    %113 = vector.load %arg9[%c0_48, %c0_49] : memref<32x3xf32, #tpu.memory_space<vmem>>, vector<32x3xf32>
    %c0_50 = arith.constant 0 : index
    %c0_51 = arith.constant 0 : index
    %114 = vector.load %arg17[%c0_50, %c0_51] : memref<32x256xf32, #tpu.memory_space<vmem>>, vector<3x256xf32>
    %cst_52 = arith.constant dense<0.000000e+00> : vector<32x256xf32>
    %115 = tpu.matmul %113, %114, %cst_52 {dimension_numbers = #tpu.dot_dimension_numbers<[1], [0], [0], [1], [0, 0, 1, 1], [], []>} : vector<32x3xf32>, vector<3x256xf32>, vector<32x256xf32> -> vector<32x256xf32>
    %116 = vector.extract_strided_slice %115 {offsets = [0, 0], sizes = [32, 128], strides = [1, 1]} : vector<32x256xf32> to vector<32x128xf32>
    %c0_53 = arith.constant 0 : index
    %c0_54 = arith.constant 0 : index
    %117 = vector.load %arg10[%c0_53, %c0_54] : memref<32x1xf32, #tpu.memory_space<vmem>>, vector<32x1xf32>
    %118 = vector.broadcast %117 : vector<32x1xf32> to vector<32x128xf32>
    %119 = arith.addf %116, %118 : vector<32x128xf32>
    %120 = arith.negf %119 : vector<32x128xf32>
    %121 = math.exp %120 : vector<32x128xf32>
    %cst_55 = arith.constant 1.000000e+00 : f32
    %122 = vector.broadcast %cst_55 : f32 to vector<32x128xf32>
    %123 = arith.addf %122, %121 : vector<32x128xf32>
    %124 = arith.divf %122, %123 : vector<32x128xf32>
    %cst_56 = arith.constant 1.000000e+00 : f32
    %125 = vector.broadcast %cst_56 : f32 to vector<32x128xf32>
    %126 = arith.subf %125, %124 : vector<32x128xf32>
    %127 = arith.mulf %124, %126 : vector<32x128xf32>
    %128 = vector.extract_strided_slice %115 {offsets = [0, 128], sizes = [32, 128], strides = [1, 1]} : vector<32x256xf32> to vector<32x128xf32>
    %129 = arith.mulf %127, %128 : vector<32x128xf32>
    %c0_57 = arith.constant 0 : index
    %c0_58 = arith.constant 0 : index
    %130 = vector.load %arg17[%c0_57, %c0_58] : memref<32x256xf32, #tpu.memory_space<vmem>>, vector<32x128xf32>
    tpu.vector_store %arg17[%c0_57, %c0_58], %124 {strides = array<i32>} : memref<32x256xf32, #tpu.memory_space<vmem>>, vector<32x128xf32>,
    %c0_59 = arith.constant 0 : index
    %c128_60 = arith.constant 128 : index
    %131 = vector.load %arg17[%c0_59, %c128_60] : memref<32x256xf32, #tpu.memory_space<vmem>>, vector<32x128xf32>
    tpu.vector_store %arg17[%c0_59, %c128_60], %129 {strides = array<i32>} : memref<32x256xf32, #tpu.memory_space<vmem>>, vector<32x128xf32>,
    %c0_61 = arith.constant 0 : index
    %c0_62 = arith.constant 0 : index
    %132 = vector.load %arg11[%c0_61, %c0_62] : memref<32x32xf32, #tpu.memory_space<vmem>>, vector<32x32xf32>
    %c0_63 = arith.constant 0 : index
    %c0_64 = arith.constant 0 : index
    %133 = vector.load %arg17[%c0_63, %c0_64] : memref<32x256xf32, #tpu.memory_space<vmem>>, vector<32x256xf32>
    %cst_65 = arith.constant dense<0.000000e+00> : vector<32x256xf32>
    %134 = tpu.matmul %132, %133, %cst_65 {dimension_numbers = #tpu.dot_dimension_numbers<[1], [0], [0], [1], [0, 0, 1, 1], [], []>} : vector<32x32xf32>, vector<32x256xf32>, vector<32x256xf32> -> vector<32x256xf32>
    %135 = vector.extract_strided_slice %134 {offsets = [0, 0], sizes = [32, 128], strides = [1, 1]} : vector<32x256xf32> to vector<32x128xf32>
    %c0_66 = arith.constant 0 : index
    %c0_67 = arith.constant 0 : index
    %136 = vector.load %arg12[%c0_66, %c0_67] : memref<32x1xf32, #tpu.memory_space<vmem>>, vector<32x1xf32>
    %137 = vector.broadcast %136 : vector<32x1xf32> to vector<32x128xf32>
    %138 = arith.addf %135, %137 : vector<32x128xf32>
    %139 = arith.negf %138 : vector<32x128xf32>
    %140 = math.exp %139 : vector<32x128xf32>
    %cst_68 = arith.constant 1.000000e+00 : f32
    %141 = vector.broadcast %cst_68 : f32 to vector<32x128xf32>
    %142 = arith.addf %141, %140 : vector<32x128xf32>
    %143 = arith.divf %141, %142 : vector<32x128xf32>
    %cst_69 = arith.constant 1.000000e+00 : f32
    %144 = vector.broadcast %cst_69 : f32 to vector<32x128xf32>
    %145 = arith.subf %144, %143 : vector<32x128xf32>
    %146 = arith.mulf %143, %145 : vector<32x128xf32>
    %147 = vector.extract_strided_slice %134 {offsets = [0, 128], sizes = [32, 128], strides = [1, 1]} : vector<32x256xf32> to vector<32x128xf32>
    %148 = arith.mulf %146, %147 : vector<32x128xf32>
    %c0_70 = arith.constant 0 : index
    %c0_71 = arith.constant 0 : index
    %149 = vector.load %arg17[%c0_70, %c0_71] : memref<32x256xf32, #tpu.memory_space<vmem>>, vector<32x128xf32>
    tpu.vector_store %arg17[%c0_70, %c0_71], %143 {strides = array<i32>} : memref<32x256xf32, #tpu.memory_space<vmem>>, vector<32x128xf32>,
    %c0_72 = arith.constant 0 : index
    %c128_73 = arith.constant 128 : index
    %150 = vector.load %arg17[%c0_72, %c128_73] : memref<32x256xf32, #tpu.memory_space<vmem>>, vector<32x128xf32>
    tpu.vector_store %arg17[%c0_72, %c128_73], %148 {strides = array<i32>} : memref<32x256xf32, #tpu.memory_space<vmem>>, vector<32x128xf32>,
    %c0_74 = arith.constant 0 : index
    %c0_75 = arith.constant 0 : index
    %151 = vector.load %arg13[%c0_74, %c0_75] : memref<16x32xf32, #tpu.memory_space<vmem>>, vector<16x32xf32>
    %c0_76 = arith.constant 0 : index
    %c0_77 = arith.constant 0 : index
    %152 = vector.load %arg17[%c0_76, %c0_77] : memref<32x256xf32, #tpu.memory_space<vmem>>, vector<32x256xf32>
    %cst_78 = arith.constant dense<0.000000e+00> : vector<16x256xf32>
    %153 = tpu.matmul %151, %152, %cst_78 {dimension_numbers = #tpu.dot_dimension_numbers<[1], [0], [0], [1], [0, 0, 1, 1], [], []>} : vector<16x32xf32>, vector<32x256xf32>, vector<16x256xf32> -> vector<16x256xf32>
    %154 = vector.extract_strided_slice %153 {offsets = [0, 0], sizes = [16, 128], strides = [1, 1]} : vector<16x256xf32> to vector<16x128xf32>
    %c0_79 = arith.constant 0 : index
    %c0_80 = arith.constant 0 : index
    %155 = vector.load %arg14[%c0_79, %c0_80] : memref<16x1xf32, #tpu.memory_space<vmem>>, vector<16x1xf32>
    %156 = vector.broadcast %155 : vector<16x1xf32> to vector<16x128xf32>
    %157 = arith.addf %154, %156 : vector<16x128xf32>
    %158 = vector.extract_strided_slice %153 {offsets = [0, 128], sizes = [16, 128], strides = [1, 1]} : vector<16x256xf32> to vector<16x128xf32>
    %c9 = arith.constant 9 : index
    %c0_81 = arith.constant 0 : index
    %159 = vector.load %arg16[%c9, %c0_81] : memref<41x128xf32, #tpu.memory_space<vmem>>, vector<16x128xf32>
    tpu.vector_store %arg16[%c9, %c0_81], %157 {strides = array<i32>} : memref<41x128xf32, #tpu.memory_space<vmem>>, vector<16x128xf32>,
    %c25 = arith.constant 25 : index
    %c0_82 = arith.constant 0 : index
    %160 = vector.load %arg16[%c25, %c0_82] : memref<41x128xf32, #tpu.memory_space<vmem>>, vector<16x128xf32>
    tpu.vector_store %arg16[%c25, %c0_82], %158 {strides = array<i32>} : memref<41x128xf32, #tpu.memory_space<vmem>>, vector<16x128xf32>,
    return
  }
  func.func @transform_0(%arg0: i32) -> (i32, i32) {
    %c0_i32 = arith.constant 0 : i32
    %c0_i32_0 = arith.constant 0 : i32
    return %c0_i32, %arg0 : i32, i32
  }
  func.func @transform_1(%arg0: i32) -> (i32, i32) {
    %c0_i32 = arith.constant 0 : i32
    %c0_i32_0 = arith.constant 0 : i32
    return %c0_i32, %arg0 : i32, i32
  }
  func.func @transform_2(%arg0: i32) -> (i32, i32) {
    %c0_i32 = arith.constant 0 : i32
    %c0_i32_0 = arith.constant 0 : i32
    %c0_i32_1 = arith.constant 0 : i32
    return %c0_i32, %c0_i32_0 : i32, i32
  }
  func.func @transform_3(%arg0: i32) -> (i32, i32) {
    %c0_i32 = arith.constant 0 : i32
    %c0_i32_0 = arith.constant 0 : i32
    %c0_i32_1 = arith.constant 0 : i32
    return %c0_i32, %c0_i32_0 : i32, i32
  }
  func.func @transform_4(%arg0: i32) -> (i32, i32) {
    %c0_i32 = arith.constant 0 : i32
    %c0_i32_0 = arith.constant 0 : i32
    %c0_i32_1 = arith.constant 0 : i32
    return %c0_i32, %c0_i32_0 : i32, i32
  }
  func.func @transform_5(%arg0: i32) -> (i32, i32) {
    %c0_i32 = arith.constant 0 : i32
    %c0_i32_0 = arith.constant 0 : i32
    %c0_i32_1 = arith.constant 0 : i32
    return %c0_i32, %c0_i32_0 : i32, i32
  }
  func.func @transform_6(%arg0: i32) -> (i32, i32) {
    %c0_i32 = arith.constant 0 : i32
    %c0_i32_0 = arith.constant 0 : i32
    %c0_i32_1 = arith.constant 0 : i32
    return %c0_i32, %c0_i32_0 : i32, i32
  }
  func.func @transform_7(%arg0: i32) -> (i32, i32) {
    %c0_i32 = arith.constant 0 : i32
    %c0_i32_0 = arith.constant 0 : i32
    %c0_i32_1 = arith.constant 0 : i32
    return %c0_i32, %c0_i32_0 : i32, i32
  }
  func.func @transform_8(%arg0: i32) -> (i32, i32) {
    %c0_i32 = arith.constant 0 : i32
    %c0_i32_0 = arith.constant 0 : i32
    %c0_i32_1 = arith.constant 0 : i32
    return %c0_i32, %c0_i32_0 : i32, i32
  }
  func.func @transform_9(%arg0: i32) -> (i32, i32) {
    %c0_i32 = arith.constant 0 : i32
    %c0_i32_0 = arith.constant 0 : i32
    %c0_i32_1 = arith.constant 0 : i32
    return %c0_i32, %c0_i32_0 : i32, i32
  }
  func.func @transform_10(%arg0: i32) -> (i32, i32) {
    %c0_i32 = arith.constant 0 : i32
    %c0_i32_0 = arith.constant 0 : i32
    %c0_i32_1 = arith.constant 0 : i32
    return %c0_i32, %c0_i32_0 : i32, i32
  }
  func.func @transform_11(%arg0: i32) -> (i32, i32) {
    %c0_i32 = arith.constant 0 : i32
    %c0_i32_0 = arith.constant 0 : i32
    %c0_i32_1 = arith.constant 0 : i32
    return %c0_i32, %c0_i32_0 : i32, i32
  }
  func.func @transform_12(%arg0: i32) -> (i32, i32) {
    %c0_i32 = arith.constant 0 : i32
    %c0_i32_0 = arith.constant 0 : i32
    %c0_i32_1 = arith.constant 0 : i32
    return %c0_i32, %c0_i32_0 : i32, i32
  }
  func.func @transform_13(%arg0: i32) -> (i32, i32) {
    %c0_i32 = arith.constant 0 : i32
    %c0_i32_0 = arith.constant 0 : i32
    %c0_i32_1 = arith.constant 0 : i32
    return %c0_i32, %c0_i32_0 : i32, i32
  }
  func.func @transform_14(%arg0: i32) -> (i32, i32) {
    %c0_i32 = arith.constant 0 : i32
    %c0_i32_0 = arith.constant 0 : i32
    %c0_i32_1 = arith.constant 0 : i32
    return %c0_i32, %c0_i32_0 : i32, i32
  }
  func.func @transform_15(%arg0: i32) -> (i32, i32) {
    %c0_i32 = arith.constant 0 : i32
    %c0_i32_0 = arith.constant 0 : i32
    return %c0_i32, %arg0 : i32, i32
  }
}

</mosaic_0001>

<llo_original>
// kernel: full_network_forward.1
$region0: #{full_network_forward.1}
  #allocation0 [shape = 'u32[]', space=smem, size = 0x4, offset = 0x4, fixed_abs, tag = 'smem constant byte address 0x4 - core index']
  #allocation1 [shape = 'u32[72,128]{1,0:T(1,128)}', space=vmem, size = 0x9000, scoped, tag = 'internal scratch']
  #allocation2 [shape = 'f32[32,256]{1,0:T(8,128)}', space=vmem, size = 0x8000, scoped, tag = 'scratch operand']
  %s0 = inlined_call_operand.vmem [shape: f32[16,128], index: 0, kind: input, shape index: {}]
  %s1 = inlined_call_operand.vmem [shape: f32[16,128], index: 1, kind: input, shape index: {}]
  %s2 = inlined_call_operand.vmem [shape: f32[32,16], index: 2, kind: input, shape index: {}]
  %s3 = inlined_call_operand.vmem [shape: f32[32,1], index: 3, kind: input, shape index: {}]
  %s4 = inlined_call_operand.vmem [shape: f32[32,32], index: 4, kind: input, shape index: {}]
  %s5 = inlined_call_operand.vmem [shape: f32[32,1], index: 5, kind: input, shape index: {}]
  %s6 = inlined_call_operand.vmem [shape: f32[3,32], index: 6, kind: input, shape index: {}]
  %s7 = inlined_call_operand.vmem [shape: f32[3,1], index: 7, kind: input, shape index: {}]
  %s8 = inlined_call_operand.vmem [shape: f32[32,3], index: 8, kind: input, shape index: {}]
  %s9 = inlined_call_operand.vmem [shape: f32[32,1], index: 9, kind: input, shape index: {}]
  %s10 = inlined_call_operand.vmem [shape: f32[32,32], index: 10, kind: input, shape index: {}]
  %s11 = inlined_call_operand.vmem [shape: f32[32,1], index: 11, kind: input, shape index: {}]
  %s12 = inlined_call_operand.vmem [shape: f32[16,32], index: 12, kind: input, shape index: {}]
  %s13 = inlined_call_operand.vmem [shape: f32[16,1], index: 13, kind: input, shape index: {}]
  %s14 = inlined_call_operand.vmem [shape: f32[3,10], index: 14, kind: input, shape index: {}]
  %s15 = inlined_call_operand.vmem [shape: f32[41,128], index: 15, kind: output, shape index: {}]
  %s16 = sld [smem:[#allocation0]]
  $region70: #{full_network_forward.1} parent=0
    _
  %s18 = ssub.s32 1, %s16
  %s19 = scalar_select 0, %s18, %s16
  // Predicated region
  $region2: #{full_network_forward.1} parent=0 // pred_check
    _
  $region3: #{full_network_forward.1} parent=0 // pred_check_branch
    %21 = sbr.rel (0) target = $region5
  $region4: #{full_network_forward.1} parent=0 // pred_region
    _
  $region5: #{full_network_forward.1} parent=0 // pred_fallthru
    _
  // Predicated region
  $region6: #{full_network_forward.1} parent=0 // pred_check
    _
  $region7: #{full_network_forward.1} parent=0 // pred_check_branch
    %23 = sbr.rel (0) target = $region9
  $region8: #{full_network_forward.1} parent=0 // pred_region
    _
  $region9: #{full_network_forward.1} parent=0 // pred_fallthru
    _
  // Predicated region
  $region10: #{full_network_forward.1} parent=0 // pred_check
    _
  $region11: #{full_network_forward.1} parent=0 // pred_check_branch
    %25 = sbr.rel (0) target = $region13
  $region12: #{full_network_forward.1} parent=0 // pred_region
    _
  $region13: #{full_network_forward.1} parent=0 // pred_fallthru
    _
  // Predicated region
  $region14: #{full_network_forward.1} parent=0 // pred_check
    _
  $region15: #{full_network_forward.1} parent=0 // pred_check_branch
    %27 = sbr.rel (0) target = $region17
  $region16: #{full_network_forward.1} parent=0 // pred_region
    _
  $region17: #{full_network_forward.1} parent=0 // pred_fallthru
    _
  // Predicated region
  $region18: #{full_network_forward.1} parent=0 // pred_check
    _
  $region19: #{full_network_forward.1} parent=0 // pred_check_branch
    %29 = sbr.rel (0) target = $region21
  $region20: #{full_network_forward.1} parent=0 // pred_region
    _
  $region21: #{full_network_forward.1} parent=0 // pred_fallthru
    _
  // Predicated region
  $region22: #{full_network_forward.1} parent=0 // pred_check
    _
  $region23: #{full_network_forward.1} parent=0 // pred_check_branch
    %31 = sbr.rel (0) target = $region25
  $region24: #{full_network_forward.1} parent=0 // pred_region
    _
  $region25: #{full_network_forward.1} parent=0 // pred_fallthru
    _
  // Predicated region
  $region26: #{full_network_forward.1} parent=0 // pred_check
    _
  $region27: #{full_network_forward.1} parent=0 // pred_check_branch
    %33 = sbr.rel (0) target = $region29
  $region28: #{full_network_forward.1} parent=0 // pred_region
    _
  $region29: #{full_network_forward.1} parent=0 // pred_fallthru
    _
  // Predicated region
  $region30: #{full_network_forward.1} parent=0 // pred_check
    _
  $region31: #{full_network_forward.1} parent=0 // pred_check_branch
    %35 = sbr.rel (0) target = $region33
  $region32: #{full_network_forward.1} parent=0 // pred_region
    _
  $region33: #{full_network_forward.1} parent=0 // pred_fallthru
    _
  // Predicated region
  $region34: #{full_network_forward.1} parent=0 // pred_check
    _
  $region35: #{full_network_forward.1} parent=0 // pred_check_branch
    %37 = sbr.rel (0) target = $region37
  $region36: #{full_network_forward.1} parent=0 // pred_region
    _
  $region37: #{full_network_forward.1} parent=0 // pred_fallthru
    _
  // Predicated region
  $region38: #{full_network_forward.1} parent=0 // pred_check
    _
  $region39: #{full_network_forward.1} parent=0 // pred_check_branch
    %39 = sbr.rel (0) target = $region41
  $region40: #{full_network_forward.1} parent=0 // pred_region
    _
  $region41: #{full_network_forward.1} parent=0 // pred_fallthru
    _
  // Predicated region
  $region42: #{full_network_forward.1} parent=0 // pred_check
    _
  $region43: #{full_network_forward.1} parent=0 // pred_check_branch
    %41 = sbr.rel (0) target = $region45
  $region44: #{full_network_forward.1} parent=0 // pred_region
    _
  $region45: #{full_network_forward.1} parent=0 // pred_fallthru
    _
  // Predicated region
  $region46: #{full_network_forward.1} parent=0 // pred_check
    _
  $region47: #{full_network_forward.1} parent=0 // pred_check_branch
    %43 = sbr.rel (0) target = $region49
  $region48: #{full_network_forward.1} parent=0 // pred_region
    _
  $region49: #{full_network_forward.1} parent=0 // pred_fallthru
    _
  // Predicated region
  $region50: #{full_network_forward.1} parent=0 // pred_check
    _
  $region51: #{full_network_forward.1} parent=0 // pred_check_branch
    %45 = sbr.rel (0) target = $region53
  $region52: #{full_network_forward.1} parent=0 // pred_region
    _
  $region53: #{full_network_forward.1} parent=0 // pred_fallthru
    _
  // Predicated region
  $region54: #{full_network_forward.1} parent=0 // pred_check
    _
  $region55: #{full_network_forward.1} parent=0 // pred_check_branch
    %47 = sbr.rel (0) target = $region57
  $region56: #{full_network_forward.1} parent=0 // pred_region
    _
  $region57: #{full_network_forward.1} parent=0 // pred_fallthru
    _
  // Predicated region
  $region58: #{full_network_forward.1} parent=0 // pred_check
    _
  $region59: #{full_network_forward.1} parent=0 // pred_check_branch
    %49 = sbr.rel (0) target = $region61
  $region60: #{full_network_forward.1} parent=0 // pred_region
    _
  $region61: #{full_network_forward.1} parent=0 // pred_fallthru
    _
  %v50 = vld [vmem:[%s0] sm:$0xff]
  %v51 = vld [vmem:[%s0 + $0x8] sm:$0xff]
  %52 = vst [vmem:[#allocation2] sm:$0xff] %v50
  %53 = vst [vmem:[#allocation2 + $0x10] sm:$0xff] %v51
  %v54 = vld [vmem:[%s1] sm:$0xff]
  %v55 = vld [vmem:[%s1 + $0x8] sm:$0xff]
  %56 = vst [vmem:[#allocation2 + $0x8] sm:$0xff] %v54
  %57 = vst [vmem:[#allocation2 + $0x18] sm:$0xff] %v55
  %v58 = vld [vmem:[%s2] sm:$0xff]
  %v59 = vld [vmem:[%s2 + $0x8] sm:$0xff]
  %v60 = vld [vmem:[%s2 + $0x10] sm:$0xff]
  %v61 = vld [vmem:[%s2 + $0x18] sm:$0xff]
  %v62 = vld [vmem:[#allocation2] sm:$0xff]
  %v63 = vld [vmem:[#allocation2 + $0x8] sm:$0xff]
  %v64 = vld [vmem:[#allocation2 + $0x10] sm:$0xff]
  %v65 = vld [vmem:[#allocation2 + $0x18] sm:$0xff]
  %vm66 = vcmask 130048
  %v68 = vsel %vm66, %v58, 0
  %v71 = vsel %vm66, %v59, 0
  %v74 = vsel %vm66, %v60, 0
  %v77 = vsel %vm66, %v61, 0
  %79 = vmatpush.msra.mxu0 0.0
  %80 = vmatpush.msra.mxu0 0.0
  %81 = vmatpush.msra.mxu0 0.0
  %82 = vmatpush.msra.mxu0 0.0
  %83 = vmatpush.msra.mxu0 0.0
  %84 = vmatpush.msra.mxu0 0.0
  %85 = vmatpush.msra.mxu0 0.0
  %86 = vmatpush.msra.mxu0 0.0
  %87 = vmatpush.msra.mxu0 0.0
  %88 = vmatpush.msra.mxu0 0.0
  %89 = vmatpush.msra.mxu0 0.0
  %90 = vmatpush.msra.mxu0 0.0
  %91 = vmatpush.msra.mxu0 0.0
  %92 = vmatpush.msra.mxu0 0.0
  %93 = vmatpush.msra.mxu0 %v64
  %94 = vmatpush.msra.mxu0 %v62
  %95 = vmatmul.f32.gmra.mxu0 %v68
  %v96 = vpop.f32.mrf.mxu0
  %v97 = vadd.f32 0.0, %v96
  %98 = vmatmul.f32.gmra.mxu0 %v71
  %v99 = vpop.f32.mrf.mxu0
  %v100 = vadd.f32 0.0, %v99
  %101 = vmatmul.f32.gmra.mxu0 %v74
  %v102 = vpop.f32.mrf.mxu0
  %v103 = vadd.f32 0.0, %v102
  %104 = vmatmul.f32.gmra.mxu0 %v77
  %v105 = vpop.f32.mrf.mxu0
  %v106 = vadd.f32 0.0, %v105
  %107 = vdwg.mxu0
  %108 = vmatpush.msra.mxu0 0.0
  %109 = vmatpush.msra.mxu0 0.0
  %110 = vmatpush.msra.mxu0 0.0
  %111 = vmatpush.msra.mxu0 0.0
  %112 = vmatpush.msra.mxu0 0.0
  %113 = vmatpush.msra.mxu0 0.0
  %114 = vmatpush.msra.mxu0 0.0
  %115 = vmatpush.msra.mxu0 0.0
  %116 = vmatpush.msra.mxu0 0.0
  %117 = vmatpush.msra.mxu0 0.0
  %118 = vmatpush.msra.mxu0 0.0
  %119 = vmatpush.msra.mxu0 0.0
  %120 = vmatpush.msra.mxu0 0.0
  %121 = vmatpush.msra.mxu0 0.0
  %122 = vmatpush.msra.mxu0 %v65
  %123 = vmatpush.msra.mxu0 %v63
  %124 = vmatmul.f32.gmra.mxu0 %v68
  %v125 = vpop.f32.mrf.mxu0
  %v126 = vadd.f32 0.0, %v125
  %127 = vmatmul.f32.gmra.mxu0 %v71
  %v128 = vpop.f32.mrf.mxu0
  %v129 = vadd.f32 0.0, %v128
  %130 = vmatmul.f32.gmra.mxu0 %v74
  %v131 = vpop.f32.mrf.mxu0
  %v132 = vadd.f32 0.0, %v131
  %133 = vmatmul.f32.gmra.mxu0 %v77
  %v134 = vpop.f32.mrf.mxu0
  %v135 = vadd.f32 0.0, %v134
  %136 = vdwg.mxu0
  %v137 = vld [vmem:[%s3] sm:$0xff]
  %v138 = vld [vmem:[%s3 + $0x8] sm:$0xff]
  %v139 = vld [vmem:[%s3 + $0x10] sm:$0xff]
  %v140 = vld [vmem:[%s3 + $0x18] sm:$0xff]
  %142 = vset.pattern.permute.xlu0 0
  %143 = vperm.xlu0 %142, %v137
  %v144 = vpop.permute.xlu0 %143
  %147 = vset.pattern.permute.xlu0 0
  %148 = vperm.xlu0 %147, %v138
  %v149 = vpop.permute.xlu0 %148
  %152 = vset.pattern.permute.xlu0 0
  %153 = vperm.xlu0 %152, %v139
  %v154 = vpop.permute.xlu0 %153
  %157 = vset.pattern.permute.xlu0 0
  %158 = vperm.xlu0 %157, %v140
  %v159 = vpop.permute.xlu0 %158
  %v161 = vadd.f32 %v97, %v144
  %v162 = vadd.f32 %v100, %v149
  %v163 = vadd.f32 %v103, %v154
  %v164 = vadd.f32 %v106, %v159
  %v165 = vxor.u32 %v161, 2147483648
  %v166 = vxor.u32 %v162, 2147483648
  %v167 = vxor.u32 %v163, 2147483648
  %v168 = vxor.u32 %v164, 2147483648
  %v169 = vmul.f32 %v165, 1.442695
  %v170 = vpow.pop %v169
  %v171 = vmul.f32 %v166, 1.442695
  %v172 = vpow.pop %v171
  %v173 = vmul.f32 %v167, 1.442695
  %v174 = vpow.pop %v173
  %v175 = vmul.f32 %v168, 1.442695
  %v176 = vpow.pop %v175
  %v177 = vadd.f32 %v170, 1.0
  %v178 = vadd.f32 %v172, 1.0
  %v179 = vadd.f32 %v174, 1.0
  %v180 = vadd.f32 %v176, 1.0
  %v181 = vrcp.pop %v177
  %v182 = vmul.f32 %v177, %v181
  %v183 = vsub.f32 1.0, %v182
  %v184 = vmul.f32 %v181, %v183
  %v185 = vadd.f32 %v181, %v184
  %vm186 = vweird.f32 %v177
  %vm187 = vweird.f32 %v181
  %vm188 = vmor %vm186, %vm187
  %v189 = vsel %vm188, %v181, %v185
  %v190 = vand.u32 2147483647, %v177
  %vm191 = vcmp.eq.f32.partialorder %v190, 8.507059e+37
  %v192 = vand.u32 %v177, 2147483648
  %v193 = vor.u32 1.1754944e-38, %v192
  %v194 = vsel %vm191, %v193, %v189
  %v195 = vmul.f32 1.0, %v194
  %v196 = vrcp.pop %v178
  %v197 = vmul.f32 %v178, %v196
  %v198 = vsub.f32 1.0, %v197
  %v199 = vmul.f32 %v196, %v198
  %v200 = vadd.f32 %v196, %v199
  %vm201 = vweird.f32 %v178
  %vm202 = vweird.f32 %v196
  %vm203 = vmor %vm201, %vm202
  %v204 = vsel %vm203, %v196, %v200
  %v205 = vand.u32 2147483647, %v178
  %vm206 = vcmp.eq.f32.partialorder %v205, 8.507059e+37
  %v207 = vand.u32 %v178, 2147483648
  %v208 = vor.u32 1.1754944e-38, %v207
  %v209 = vsel %vm206, %v208, %v204
  %v210 = vmul.f32 1.0, %v209
  %v211 = vrcp.pop %v179
  %v212 = vmul.f32 %v179, %v211
  %v213 = vsub.f32 1.0, %v212
  %v214 = vmul.f32 %v211, %v213
  %v215 = vadd.f32 %v211, %v214
  %vm216 = vweird.f32 %v179
  %vm217 = vweird.f32 %v211
  %vm218 = vmor %vm216, %vm217
  %v219 = vsel %vm218, %v211, %v215
  %v220 = vand.u32 2147483647, %v179
  %vm221 = vcmp.eq.f32.partialorder %v220, 8.507059e+37
  %v222 = vand.u32 %v179, 2147483648
  %v223 = vor.u32 1.1754944e-38, %v222
  %v224 = vsel %vm221, %v223, %v219
  %v225 = vmul.f32 1.0, %v224
  %v226 = vrcp.pop %v180
  %v227 = vmul.f32 %v180, %v226
  %v228 = vsub.f32 1.0, %v227
  %v229 = vmul.f32 %v226, %v228
  %v230 = vadd.f32 %v226, %v229
  %vm231 = vweird.f32 %v180
  %vm232 = vweird.f32 %v226
  %vm233 = vmor %vm231, %vm232
  %v234 = vsel %vm233, %v226, %v230
  %v235 = vand.u32 2147483647, %v180
  %vm236 = vcmp.eq.f32.partialorder %v235, 8.507059e+37
  %v237 = vand.u32 %v180, 2147483648
  %v238 = vor.u32 1.1754944e-38, %v237
  %v239 = vsel %vm236, %v238, %v234
  %v240 = vmul.f32 1.0, %v239
  %v241 = vsub.f32 1.0, %v195
  %v242 = vsub.f32 1.0, %v210
  %v243 = vsub.f32 1.0, %v225
  %v244 = vsub.f32 1.0, %v240
  %v245 = vmul.f32 %v195, %v241
  %v246 = vmul.f32 %v210, %v242
  %v247 = vmul.f32 %v225, %v243
  %v248 = vmul.f32 %v240, %v244
  %v249 = vmul.f32 %v245, %v126
  %v250 = vmul.f32 %v246, %v129
  %v251 = vmul.f32 %v247, %v132
  %v252 = vmul.f32 %v248, %v135
  %253 = vst [vmem:[#allocation2] sm:$0xff] %v195
  %254 = vst [vmem:[#allocation2 + $0x10] sm:$0xff] %v210
  %255 = vst [vmem:[#allocation2 + $0x20] sm:$0xff] %v225
  %256 = vst [vmem:[#allocation2 + $0x30] sm:$0xff] %v240
  %257 = vst [vmem:[#allocation2 + $0x8] sm:$0xff] %v249
  %258 = vst [vmem:[#allocation2 + $0x18] sm:$0xff] %v250
  %259 = vst [vmem:[#allocation2 + $0x28] sm:$0xff] %v251
  %260 = vst [vmem:[#allocation2 + $0x38] sm:$0xff] %v252
  %v261 = vld [vmem:[%s4] sm:$0xff]
  %v262 = vld [vmem:[%s4 + $0x8] sm:$0xff]
  %v263 = vld [vmem:[%s4 + $0x10] sm:$0xff]
  %v264 = vld [vmem:[%s4 + $0x18] sm:$0xff]
  %v265 = vld [vmem:[#allocation2] sm:$0xff]
  %v266 = vld [vmem:[#allocation2 + $0x8] sm:$0xff]
  %v267 = vld [vmem:[#allocation2 + $0x10] sm:$0xff]
  %v268 = vld [vmem:[#allocation2 + $0x18] sm:$0xff]
  %v269 = vld [vmem:[#allocation2 + $0x20] sm:$0xff]
  %v270 = vld [vmem:[#allocation2 + $0x28] sm:$0xff]
  %v271 = vld [vmem:[#allocation2 + $0x30] sm:$0xff]
  %v272 = vld [vmem:[#allocation2 + $0x38] sm:$0xff]
  %vm273 = vcmask 261120
  %v275 = vsel %vm273, %v261, 0
  %v278 = vsel %vm273, %v262, 0
  %v281 = vsel %vm273, %v263, 0
  %v284 = vsel %vm273, %v264, 0
  %286 = vmatpush.msra.mxu0 0.0
  %287 = vmatpush.msra.mxu0 0.0
  %288 = vmatpush.msra.mxu0 0.0
  %289 = vmatpush.msra.mxu0 0.0
  %290 = vmatpush.msra.mxu0 0.0
  %291 = vmatpush.msra.mxu0 0.0
  %292 = vmatpush.msra.mxu0 0.0
  %293 = vmatpush.msra.mxu0 0.0
  %294 = vmatpush.msra.mxu0 0.0
  %295 = vmatpush.msra.mxu0 0.0
  %296 = vmatpush.msra.mxu0 0.0
  %297 = vmatpush.msra.mxu0 0.0
  %298 = vmatpush.msra.mxu0 %v271
  %299 = vmatpush.msra.mxu0 %v269
  %300 = vmatpush.msra.mxu0 %v267
  %301 = vmatpush.msra.mxu0 %v265
  %302 = vmatmul.f32.gmra.mxu0 %v275
  %v303 = vpop.f32.mrf.mxu0
  %v304 = vadd.f32 0.0, %v303
  %305 = vmatmul.f32.gmra.mxu0 %v278
  %v306 = vpop.f32.mrf.mxu0
  %v307 = vadd.f32 0.0, %v306
  %308 = vmatmul.f32.gmra.mxu0 %v281
  %v309 = vpop.f32.mrf.mxu0
  %v310 = vadd.f32 0.0, %v309
  %311 = vmatmul.f32.gmra.mxu0 %v284
  %v312 = vpop.f32.mrf.mxu0
  %v313 = vadd.f32 0.0, %v312
  %314 = vdwg.mxu0
  %315 = vmatpush.msra.mxu0 0.0
  %316 = vmatpush.msra.mxu0 0.0
  %317 = vmatpush.msra.mxu0 0.0
  %318 = vmatpush.msra.mxu0 0.0
  %319 = vmatpush.msra.mxu0 0.0
  %320 = vmatpush.msra.mxu0 0.0
  %321 = vmatpush.msra.mxu0 0.0
  %322 = vmatpush.msra.mxu0 0.0
  %323 = vmatpush.msra.mxu0 0.0
  %324 = vmatpush.msra.mxu0 0.0
  %325 = vmatpush.msra.mxu0 0.0
  %326 = vmatpush.msra.mxu0 0.0
  %327 = vmatpush.msra.mxu0 %v272
  %328 = vmatpush.msra.mxu0 %v270
  %329 = vmatpush.msra.mxu0 %v268
  %330 = vmatpush.msra.mxu0 %v266
  %331 = vmatmul.f32.gmra.mxu0 %v275
  %v332 = vpop.f32.mrf.mxu0
  %v333 = vadd.f32 0.0, %v332
  %334 = vmatmul.f32.gmra.mxu0 %v278
  %v335 = vpop.f32.mrf.mxu0
  %v336 = vadd.f32 0.0, %v335
  %337 = vmatmul.f32.gmra.mxu0 %v281
  %v338 = vpop.f32.mrf.mxu0
  %v339 = vadd.f32 0.0, %v338
  %340 = vmatmul.f32.gmra.mxu0 %v284
  %v341 = vpop.f32.mrf.mxu0
  %v342 = vadd.f32 0.0, %v341
  %343 = vdwg.mxu0
  %v344 = vld [vmem:[%s5] sm:$0xff]
  %v345 = vld [vmem:[%s5 + $0x8] sm:$0xff]
  %v346 = vld [vmem:[%s5 + $0x10] sm:$0xff]
  %v347 = vld [vmem:[%s5 + $0x18] sm:$0xff]
  %349 = vset.pattern.permute.xlu0 0
  %350 = vperm.xlu0 %349, %v344
  %v351 = vpop.permute.xlu0 %350
  %354 = vset.pattern.permute.xlu0 0
  %355 = vperm.xlu0 %354, %v345
  %v356 = vpop.permute.xlu0 %355
  %359 = vset.pattern.permute.xlu0 0
  %360 = vperm.xlu0 %359, %v346
  %v361 = vpop.permute.xlu0 %360
  %364 = vset.pattern.permute.xlu0 0
  %365 = vperm.xlu0 %364, %v347
  %v366 = vpop.permute.xlu0 %365
  %v368 = vadd.f32 %v304, %v351
  %v369 = vadd.f32 %v307, %v356
  %v370 = vadd.f32 %v310, %v361
  %v371 = vadd.f32 %v313, %v366
  %v372 = vxor.u32 %v368, 2147483648
  %v373 = vxor.u32 %v369, 2147483648
  %v374 = vxor.u32 %v370, 2147483648
  %v375 = vxor.u32 %v371, 2147483648
  %v376 = vmul.f32 %v372, 1.442695
  %v377 = vpow.pop %v376
  %v378 = vmul.f32 %v373, 1.442695
  %v379 = vpow.pop %v378
  %v380 = vmul.f32 %v374, 1.442695
  %v381 = vpow.pop %v380
  %v382 = vmul.f32 %v375, 1.442695
  %v383 = vpow.pop %v382
  %v384 = vadd.f32 %v377, 1.0
  %v385 = vadd.f32 %v379, 1.0
  %v386 = vadd.f32 %v381, 1.0
  %v387 = vadd.f32 %v383, 1.0
  %v388 = vrcp.pop %v384
  %v389 = vmul.f32 %v384, %v388
  %v390 = vsub.f32 1.0, %v389
  %v391 = vmul.f32 %v388, %v390
  %v392 = vadd.f32 %v388, %v391
  %vm393 = vweird.f32 %v384
  %vm394 = vweird.f32 %v388
  %vm395 = vmor %vm393, %vm394
  %v396 = vsel %vm395, %v388, %v392
  %v397 = vand.u32 2147483647, %v384
  %vm398 = vcmp.eq.f32.partialorder %v397, 8.507059e+37
  %v399 = vand.u32 %v384, 2147483648
  %v400 = vor.u32 1.1754944e-38, %v399
  %v401 = vsel %vm398, %v400, %v396
  %v402 = vmul.f32 1.0, %v401
  %v403 = vrcp.pop %v385
  %v404 = vmul.f32 %v385, %v403
  %v405 = vsub.f32 1.0, %v404
  %v406 = vmul.f32 %v403, %v405
  %v407 = vadd.f32 %v403, %v406
  %vm408 = vweird.f32 %v385
  %vm409 = vweird.f32 %v403
  %vm410 = vmor %vm408, %vm409
  %v411 = vsel %vm410, %v403, %v407
  %v412 = vand.u32 2147483647, %v385
  %vm413 = vcmp.eq.f32.partialorder %v412, 8.507059e+37
  %v414 = vand.u32 %v385, 2147483648
  %v415 = vor.u32 1.1754944e-38, %v414
  %v416 = vsel %vm413, %v415, %v411
  %v417 = vmul.f32 1.0, %v416
  %v418 = vrcp.pop %v386
  %v419 = vmul.f32 %v386, %v418
  %v420 = vsub.f32 1.0, %v419
  %v421 = vmul.f32 %v418, %v420
  %v422 = vadd.f32 %v418, %v421
  %vm423 = vweird.f32 %v386
  %vm424 = vweird.f32 %v418
  %vm425 = vmor %vm423, %vm424
  %v426 = vsel %vm425, %v418, %v422
  %v427 = vand.u32 2147483647, %v386
  %vm428 = vcmp.eq.f32.partialorder %v427, 8.507059e+37
  %v429 = vand.u32 %v386, 2147483648
  %v430 = vor.u32 1.1754944e-38, %v429
  %v431 = vsel %vm428, %v430, %v426
  %v432 = vmul.f32 1.0, %v431
  %v433 = vrcp.pop %v387
  %v434 = vmul.f32 %v387, %v433
  %v435 = vsub.f32 1.0, %v434
  %v436 = vmul.f32 %v433, %v435
  %v437 = vadd.f32 %v433, %v436
  %vm438 = vweird.f32 %v387
  %vm439 = vweird.f32 %v433
  %vm440 = vmor %vm438, %vm439
  %v441 = vsel %vm440, %v433, %v437
  %v442 = vand.u32 2147483647, %v387
  %vm443 = vcmp.eq.f32.partialorder %v442, 8.507059e+37
  %v444 = vand.u32 %v387, 2147483648
  %v445 = vor.u32 1.1754944e-38, %v444
  %v446 = vsel %vm443, %v445, %v441
  %v447 = vmul.f32 1.0, %v446
  %v448 = vsub.f32 1.0, %v402
  %v449 = vsub.f32 1.0, %v417
  %v450 = vsub.f32 1.0, %v432
  %v451 = vsub.f32 1.0, %v447
  %v452 = vmul.f32 %v402, %v448
  %v453 = vmul.f32 %v417, %v449
  %v454 = vmul.f32 %v432, %v450
  %v455 = vmul.f32 %v447, %v451
  %v456 = vmul.f32 %v452, %v333
  %v457 = vmul.f32 %v453, %v336
  %v458 = vmul.f32 %v454, %v339
  %v459 = vmul.f32 %v455, %v342
  %460 = vst [vmem:[#allocation2] sm:$0xff] %v402
  %461 = vst [vmem:[#allocation2 + $0x10] sm:$0xff] %v417
  %462 = vst [vmem:[#allocation2 + $0x20] sm:$0xff] %v432
  %463 = vst [vmem:[#allocation2 + $0x30] sm:$0xff] %v447
  %464 = vst [vmem:[#allocation2 + $0x8] sm:$0xff] %v456
  %465 = vst [vmem:[#allocation2 + $0x18] sm:$0xff] %v457
  %466 = vst [vmem:[#allocation2 + $0x28] sm:$0xff] %v458
  %467 = vst [vmem:[#allocation2 + $0x38] sm:$0xff] %v459
  %v468 = vld [vmem:[%s6] sm:$0x7]
  %v469 = vld [vmem:[#allocation2] sm:$0xff]
  %v470 = vld [vmem:[#allocation2 + $0x8] sm:$0xff]
  %v471 = vld [vmem:[#allocation2 + $0x10] sm:$0xff]
  %v472 = vld [vmem:[#allocation2 + $0x18] sm:$0xff]
  %v473 = vld [vmem:[#allocation2 + $0x20] sm:$0xff]
  %v474 = vld [vmem:[#allocation2 + $0x28] sm:$0xff]
  %v475 = vld [vmem:[#allocation2 + $0x30] sm:$0xff]
  %v476 = vld [vmem:[#allocation2 + $0x38] sm:$0xff]
  %v478 = vsel %vm273, %v468, 0
  %480 = vmatpush.msra.mxu0 0.0
  %481 = vmatpush.msra.mxu0 0.0
  %482 = vmatpush.msra.mxu0 0.0
  %483 = vmatpush.msra.mxu0 0.0
  %484 = vmatpush.msra.mxu0 0.0
  %485 = vmatpush.msra.mxu0 0.0
  %486 = vmatpush.msra.mxu0 0.0
  %487 = vmatpush.msra.mxu0 0.0
  %488 = vmatpush.msra.mxu0 0.0
  %489 = vmatpush.msra.mxu0 0.0
  %490 = vmatpush.msra.mxu0 0.0
  %491 = vmatpush.msra.mxu0 0.0
  %492 = vmatpush.msra.mxu0 %v475
  %493 = vmatpush.msra.mxu0 %v473
  %494 = vmatpush.msra.mxu0 %v471
  %495 = vmatpush.msra.mxu0 %v469
  %496 = vmatmul.f32.gmra.mxu0 %v478
  %v497 = vpop.f32.mrf.mxu0
  %v498 = vadd.f32 0.0, %v497
  %499 = vdwg.mxu0
  %500 = vmatpush.msra.mxu0 0.0
  %501 = vmatpush.msra.mxu0 0.0
  %502 = vmatpush.msra.mxu0 0.0
  %503 = vmatpush.msra.mxu0 0.0
  %504 = vmatpush.msra.mxu0 0.0
  %505 = vmatpush.msra.mxu0 0.0
  %506 = vmatpush.msra.mxu0 0.0
  %507 = vmatpush.msra.mxu0 0.0
  %508 = vmatpush.msra.mxu0 0.0
  %509 = vmatpush.msra.mxu0 0.0
  %510 = vmatpush.msra.mxu0 0.0
  %511 = vmatpush.msra.mxu0 0.0
  %512 = vmatpush.msra.mxu0 %v476
  %513 = vmatpush.msra.mxu0 %v474
  %514 = vmatpush.msra.mxu0 %v472
  %515 = vmatpush.msra.mxu0 %v470
  %516 = vmatmul.f32.gmra.mxu0 %v478
  %v517 = vpop.f32.mrf.mxu0
  %v518 = vadd.f32 0.0, %v517
  %519 = vdwg.mxu0
  %v520 = vld [vmem:[%s7] sm:$0x7]
  %522 = vset.pattern.permute.xlu0 0
  %523 = vperm.xlu0 %522, %v520
  %v524 = vpop.permute.xlu0 %523
  %v526 = vadd.f32 %v498, %v524
  %527 = vst [vmem:[%s15] sm:$0x7] %v526
  %528 = vst [vmem:[%s15 + $0x3] sm:$0x7] %v518
  %v529 = vld [vmem:[%s14] sm:$0x7]
  %531 = vset.pattern.permute.xlu0 0
  %532 = vperm.xlu0 %531, %v529
  %v533 = vpop.permute.xlu0 %532
  %535 = vset.pattern.permute.xlu0 1
  %536 = vperm.xlu0 %535, %v529
  %v537 = vpop.permute.xlu0 %536
  %v539 = vperm.slane %v526, 0
  %v540 = vmul.f32 %v537, %v539
  %v541 = vadd.f32 %v533, %v540
  %542 = vset.pattern.permute.xlu0 2
  %543 = vperm.xlu0 %542, %v529
  %v544 = vpop.permute.xlu0 %543
  %v546 = vperm.slane %v526, 1
  %v547 = vmul.f32 %v544, %v546
  %v548 = vadd.f32 %v541, %v547
  %549 = vset.pattern.permute.xlu0 3
  %550 = vperm.xlu0 %549, %v529
  %v551 = vpop.permute.xlu0 %550
  %v553 = vperm.slane %v526, 2
  %v554 = vmul.f32 %v551, %v553
  %v555 = vadd.f32 %v548, %v554
  %v556 = vmul.f32 %v526, %v526
  %557 = vset.pattern.permute.xlu0 4
  %558 = vperm.xlu0 %557, %v529
  %v559 = vpop.permute.xlu0 %558
  %v561 = vperm.slane %v556, 0
  %v562 = vmul.f32 %v559, %v561
  %v563 = vadd.f32 %v555, %v562
  %v565 = vrot.slane %v526, 1
  %v567 = vmul.f32 %v526, %v565
  %568 = vset.pattern.permute.xlu0 5
  %569 = vperm.xlu0 %568, %v529
  %v570 = vpop.permute.xlu0 %569
  %v572 = vperm.slane %v567, 0
  %v573 = vmul.f32 %v570, %v572
  %v574 = vadd.f32 %v563, %v573
  %v575 = vrot.slane %v526, 2
  %v577 = vmul.f32 %v526, %v575
  %578 = vset.pattern.permute.xlu0 6
  %579 = vperm.xlu0 %578, %v529
  %v580 = vpop.permute.xlu0 %579
  %v582 = vperm.slane %v577, 0
  %v583 = vmul.f32 %v580, %v582
  %v584 = vadd.f32 %v574, %v583
  %585 = vset.pattern.permute.xlu0 7
  %586 = vperm.xlu0 %585, %v529
  %v587 = vpop.permute.xlu0 %586
  %v589 = vperm.slane %v556, 1
  %v590 = vmul.f32 %v587, %v589
  %v591 = vadd.f32 %v584, %v590
  %592 = vset.pattern.permute.xlu0 8
  %593 = vperm.xlu0 %592, %v529
  %v594 = vpop.permute.xlu0 %593
  %v596 = vperm.slane %v567, 1
  %v597 = vmul.f32 %v594, %v596
  %v598 = vadd.f32 %v591, %v597
  %599 = vset.pattern.permute.xlu0 9
  %600 = vperm.xlu0 %599, %v529
  %v601 = vpop.permute.xlu0 %600
  %v603 = vperm.slane %v556, 2
  %v604 = vmul.f32 %v601, %v603
  %v605 = vadd.f32 %v598, %v604
  %606 = vst [vmem:[%s15 + $0x6] sm:$0x7] %v605
  %607 = vst [vmem:[#allocation2] sm:$0x7] %v526
  %608 = vst [vmem:[#allocation2 + $0x8] sm:$0x7] %v605
  %v609 = vld [vmem:[%s8] sm:$0xff]
  %v610 = vld [vmem:[%s8 + $0x8] sm:$0xff]
  %v611 = vld [vmem:[%s8 + $0x10] sm:$0xff]
  %v612 = vld [vmem:[%s8 + $0x18] sm:$0xff]
  %v613 = vld [vmem:[#allocation2] sm:$0x7]
  %v614 = vld [vmem:[#allocation2 + $0x8] sm:$0x7]
  %vm615 = vcmask 23552
  %v617 = vsel %vm615, %v609, 0
  %v620 = vsel %vm615, %v610, 0
  %v623 = vsel %vm615, %v611, 0
  %v626 = vsel %vm615, %v612, 0
  %vm628 = vcmask 1042432
  %v630 = vsel %vm628, %v613, 0
  %v633 = vsel %vm628, %v614, 0
  %635 = vmatpush.msra.mxu0 0.0
  %636 = vmatpush.msra.mxu0 0.0
  %637 = vmatpush.msra.mxu0 0.0
  %638 = vmatpush.msra.mxu0 0.0
  %639 = vmatpush.msra.mxu0 0.0
  %640 = vmatpush.msra.mxu0 0.0
  %641 = vmatpush.msra.mxu0 0.0
  %642 = vmatpush.msra.mxu0 0.0
  %643 = vmatpush.msra.mxu0 0.0
  %644 = vmatpush.msra.mxu0 0.0
  %645 = vmatpush.msra.mxu0 0.0
  %646 = vmatpush.msra.mxu0 0.0
  %647 = vmatpush.msra.mxu0 0.0
  %648 = vmatpush.msra.mxu0 0.0
  %649 = vmatpush.msra.mxu0 0.0
  %650 = vmatpush.msra.mxu0 %v630
  %651 = vmatmul.f32.gmra.mxu0 %v617
  %v652 = vpop.f32.mrf.mxu0
  %v653 = vadd.f32 0.0, %v652
  %654 = vmatmul.f32.gmra.mxu0 %v620
  %v655 = vpop.f32.mrf.mxu0
  %v656 = vadd.f32 0.0, %v655
  %657 = vmatmul.f32.gmra.mxu0 %v623
  %v658 = vpop.f32.mrf.mxu0
  %v659 = vadd.f32 0.0, %v658
  %660 = vmatmul.f32.gmra.mxu0 %v626
  %v661 = vpop.f32.mrf.mxu0
  %v662 = vadd.f32 0.0, %v661
  %663 = vdwg.mxu0
  %664 = vmatpush.msra.mxu0 0.0
  %665 = vmatpush.msra.mxu0 0.0
  %666 = vmatpush.msra.mxu0 0.0
  %667 = vmatpush.msra.mxu0 0.0
  %668 = vmatpush.msra.mxu0 0.0
  %669 = vmatpush.msra.mxu0 0.0
  %670 = vmatpush.msra.mxu0 0.0
  %671 = vmatpush.msra.mxu0 0.0
  %672 = vmatpush.msra.mxu0 0.0
  %673 = vmatpush.msra.mxu0 0.0
  %674 = vmatpush.msra.mxu0 0.0
  %675 = vmatpush.msra.mxu0 0.0
  %676 = vmatpush.msra.mxu0 0.0
  %677 = vmatpush.msra.mxu0 0.0
  %678 = vmatpush.msra.mxu0 0.0
  %679 = vmatpush.msra.mxu0 %v633
  %680 = vmatmul.f32.gmra.mxu0 %v617
  %v681 = vpop.f32.mrf.mxu0
  %v682 = vadd.f32 0.0, %v681
  %683 = vmatmul.f32.gmra.mxu0 %v620
  %v684 = vpop.f32.mrf.mxu0
  %v685 = vadd.f32 0.0, %v684
  %686 = vmatmul.f32.gmra.mxu0 %v623
  %v687 = vpop.f32.mrf.mxu0
  %v688 = vadd.f32 0.0, %v687
  %689 = vmatmul.f32.gmra.mxu0 %v626
  %v690 = vpop.f32.mrf.mxu0
  %v691 = vadd.f32 0.0, %v690
  %692 = vdwg.mxu0
  %v693 = vld [vmem:[%s9] sm:$0xff]
  %v694 = vld [vmem:[%s9 + $0x8] sm:$0xff]
  %v695 = vld [vmem:[%s9 + $0x10] sm:$0xff]
  %v696 = vld [vmem:[%s9 + $0x18] sm:$0xff]
  %698 = vset.pattern.permute.xlu0 0
  %699 = vperm.xlu0 %698, %v693
  %v700 = vpop.permute.xlu0 %699
  %703 = vset.pattern.permute.xlu0 0
  %704 = vperm.xlu0 %703, %v694
  %v705 = vpop.permute.xlu0 %704
  %708 = vset.pattern.permute.xlu0 0
  %709 = vperm.xlu0 %708, %v695
  %v710 = vpop.permute.xlu0 %709
  %713 = vset.pattern.permute.xlu0 0
  %714 = vperm.xlu0 %713, %v696
  %v715 = vpop.permute.xlu0 %714
  %v717 = vadd.f32 %v653, %v700
  %v718 = vadd.f32 %v656, %v705
  %v719 = vadd.f32 %v659, %v710
  %v720 = vadd.f32 %v662, %v715
  %v721 = vxor.u32 %v717, 2147483648
  %v722 = vxor.u32 %v718, 2147483648
  %v723 = vxor.u32 %v719, 2147483648
  %v724 = vxor.u32 %v720, 2147483648
  %v725 = vmul.f32 %v721, 1.442695
  %v726 = vpow.pop %v725
  %v727 = vmul.f32 %v722, 1.442695
  %v728 = vpow.pop %v727
  %v729 = vmul.f32 %v723, 1.442695
  %v730 = vpow.pop %v729
  %v731 = vmul.f32 %v724, 1.442695
  %v732 = vpow.pop %v731
  %v733 = vadd.f32 %v726, 1.0
  %v734 = vadd.f32 %v728, 1.0
  %v735 = vadd.f32 %v730, 1.0
  %v736 = vadd.f32 %v732, 1.0
  %v737 = vrcp.pop %v733
  %v738 = vmul.f32 %v733, %v737
  %v739 = vsub.f32 1.0, %v738
  %v740 = vmul.f32 %v737, %v739
  %v741 = vadd.f32 %v737, %v740
  %vm742 = vweird.f32 %v733
  %vm743 = vweird.f32 %v737
  %vm744 = vmor %vm742, %vm743
  %v745 = vsel %vm744, %v737, %v741
  %v746 = vand.u32 2147483647, %v733
  %vm747 = vcmp.eq.f32.partialorder %v746, 8.507059e+37
  %v748 = vand.u32 %v733, 2147483648
  %v749 = vor.u32 1.1754944e-38, %v748
  %v750 = vsel %vm747, %v749, %v745
  %v751 = vmul.f32 1.0, %v750
  %v752 = vrcp.pop %v734
  %v753 = vmul.f32 %v734, %v752
  %v754 = vsub.f32 1.0, %v753
  %v755 = vmul.f32 %v752, %v754
  %v756 = vadd.f32 %v752, %v755
  %vm757 = vweird.f32 %v734
  %vm758 = vweird.f32 %v752
  %vm759 = vmor %vm757, %vm758
  %v760 = vsel %vm759, %v752, %v756
  %v761 = vand.u32 2147483647, %v734
  %vm762 = vcmp.eq.f32.partialorder %v761, 8.507059e+37
  %v763 = vand.u32 %v734, 2147483648
  %v764 = vor.u32 1.1754944e-38, %v763
  %v765 = vsel %vm762, %v764, %v760
  %v766 = vmul.f32 1.0, %v765
  %v767 = vrcp.pop %v735
  %v768 = vmul.f32 %v735, %v767
  %v769 = vsub.f32 1.0, %v768
  %v770 = vmul.f32 %v767, %v769
  %v771 = vadd.f32 %v767, %v770
  %vm772 = vweird.f32 %v735
  %vm773 = vweird.f32 %v767
  %vm774 = vmor %vm772, %vm773
  %v775 = vsel %vm774, %v767, %v771
  %v776 = vand.u32 2147483647, %v735
  %vm777 = vcmp.eq.f32.partialorder %v776, 8.507059e+37
  %v778 = vand.u32 %v735, 2147483648
  %v779 = vor.u32 1.1754944e-38, %v778
  %v780 = vsel %vm777, %v779, %v775
  %v781 = vmul.f32 1.0, %v780
  %v782 = vrcp.pop %v736
  %v783 = vmul.f32 %v736, %v782
  %v784 = vsub.f32 1.0, %v783
  %v785 = vmul.f32 %v782, %v784
  %v786 = vadd.f32 %v782, %v785
  %vm787 = vweird.f32 %v736
  %vm788 = vweird.f32 %v782
  %vm789 = vmor %vm787, %vm788
  %v790 = vsel %vm789, %v782, %v786
  %v791 = vand.u32 2147483647, %v736
  %vm792 = vcmp.eq.f32.partialorder %v791, 8.507059e+37
  %v793 = vand.u32 %v736, 2147483648
  %v794 = vor.u32 1.1754944e-38, %v793
  %v795 = vsel %vm792, %v794, %v790
  %v796 = vmul.f32 1.0, %v795
  %v797 = vsub.f32 1.0, %v751
  %v798 = vsub.f32 1.0, %v766
  %v799 = vsub.f32 1.0, %v781
  %v800 = vsub.f32 1.0, %v796
  %v801 = vmul.f32 %v751, %v797
  %v802 = vmul.f32 %v766, %v798
  %v803 = vmul.f32 %v781, %v799
  %v804 = vmul.f32 %v796, %v800
  %v805 = vmul.f32 %v801, %v682
  %v806 = vmul.f32 %v802, %v685
  %v807 = vmul.f32 %v803, %v688
  %v808 = vmul.f32 %v804, %v691
  %809 = vst [vmem:[#allocation2] sm:$0xff] %v751
  %810 = vst [vmem:[#allocation2 + $0x10] sm:$0xff] %v766
  %811 = vst [vmem:[#allocation2 + $0x20] sm:$0xff] %v781
  %812 = vst [vmem:[#allocation2 + $0x30] sm:$0xff] %v796
  %813 = vst [vmem:[#allocation2 + $0x8] sm:$0xff] %v805
  %814 = vst [vmem:[#allocation2 + $0x18] sm:$0xff] %v806
  %815 = vst [vmem:[#allocation2 + $0x28] sm:$0xff] %v807
  %816 = vst [vmem:[#allocation2 + $0x38] sm:$0xff] %v808
  %v817 = vld [vmem:[%s10] sm:$0xff]
  %v818 = vld [vmem:[%s10 + $0x8] sm:$0xff]
  %v819 = vld [vmem:[%s10 + $0x10] sm:$0xff]
  %v820 = vld [vmem:[%s10 + $0x18] sm:$0xff]
  %v821 = vld [vmem:[#allocation2] sm:$0xff]
  %v822 = vld [vmem:[#allocation2 + $0x8] sm:$0xff]
  %v823 = vld [vmem:[#allocation2 + $0x10] sm:$0xff]
  %v824 = vld [vmem:[#allocation2 + $0x18] sm:$0xff]
  %v825 = vld [vmem:[#allocation2 + $0x20] sm:$0xff]
  %v826 = vld [vmem:[#allocation2 + $0x28] sm:$0xff]
  %v827 = vld [vmem:[#allocation2 + $0x30] sm:$0xff]
  %v828 = vld [vmem:[#allocation2 + $0x38] sm:$0xff]
  %v830 = vsel %vm273, %v817, 0
  %v833 = vsel %vm273, %v818, 0
  %v836 = vsel %vm273, %v819, 0
  %v839 = vsel %vm273, %v820, 0
  %841 = vmatpush.msra.mxu0 0.0
  %842 = vmatpush.msra.mxu0 0.0
  %843 = vmatpush.msra.mxu0 0.0
  %844 = vmatpush.msra.mxu0 0.0
  %845 = vmatpush.msra.mxu0 0.0
  %846 = vmatpush.msra.mxu0 0.0
  %847 = vmatpush.msra.mxu0 0.0
  %848 = vmatpush.msra.mxu0 0.0
  %849 = vmatpush.msra.mxu0 0.0
  %850 = vmatpush.msra.mxu0 0.0
  %851 = vmatpush.msra.mxu0 0.0
  %852 = vmatpush.msra.mxu0 0.0
  %853 = vmatpush.msra.mxu0 %v827
  %854 = vmatpush.msra.mxu0 %v825
  %855 = vmatpush.msra.mxu0 %v823
  %856 = vmatpush.msra.mxu0 %v821
  %857 = vmatmul.f32.gmra.mxu0 %v830
  %v858 = vpop.f32.mrf.mxu0
  %v859 = vadd.f32 0.0, %v858
  %860 = vmatmul.f32.gmra.mxu0 %v833
  %v861 = vpop.f32.mrf.mxu0
  %v862 = vadd.f32 0.0, %v861
  %863 = vmatmul.f32.gmra.mxu0 %v836
  %v864 = vpop.f32.mrf.mxu0
  %v865 = vadd.f32 0.0, %v864
  %866 = vmatmul.f32.gmra.mxu0 %v839
  %v867 = vpop.f32.mrf.mxu0
  %v868 = vadd.f32 0.0, %v867
  %869 = vdwg.mxu0
  %870 = vmatpush.msra.mxu0 0.0
  %871 = vmatpush.msra.mxu0 0.0
  %872 = vmatpush.msra.mxu0 0.0
  %873 = vmatpush.msra.mxu0 0.0
  %874 = vmatpush.msra.mxu0 0.0
  %875 = vmatpush.msra.mxu0 0.0
  %876 = vmatpush.msra.mxu0 0.0
  %877 = vmatpush.msra.mxu0 0.0
  %878 = vmatpush.msra.mxu0 0.0
  %879 = vmatpush.msra.mxu0 0.0
  %880 = vmatpush.msra.mxu0 0.0
  %881 = vmatpush.msra.mxu0 0.0
  %882 = vmatpush.msra.mxu0 %v828
  %883 = vmatpush.msra.mxu0 %v826
  %884 = vmatpush.msra.mxu0 %v824
  %885 = vmatpush.msra.mxu0 %v822
  %886 = vmatmul.f32.gmra.mxu0 %v830
  %v887 = vpop.f32.mrf.mxu0
  %v888 = vadd.f32 0.0, %v887
  %889 = vmatmul.f32.gmra.mxu0 %v833
  %v890 = vpop.f32.mrf.mxu0
  %v891 = vadd.f32 0.0, %v890
  %892 = vmatmul.f32.gmra.mxu0 %v836
  %v893 = vpop.f32.mrf.mxu0
  %v894 = vadd.f32 0.0, %v893
  %895 = vmatmul.f32.gmra.mxu0 %v839
  %v896 = vpop.f32.mrf.mxu0
  %v897 = vadd.f32 0.0, %v896
  %898 = vdwg.mxu0
  %v899 = vld [vmem:[%s11] sm:$0xff]
  %v900 = vld [vmem:[%s11 + $0x8] sm:$0xff]
  %v901 = vld [vmem:[%s11 + $0x10] sm:$0xff]
  %v902 = vld [vmem:[%s11 + $0x18] sm:$0xff]
  %904 = vset.pattern.permute.xlu0 0
  %905 = vperm.xlu0 %904, %v899
  %v906 = vpop.permute.xlu0 %905
  %909 = vset.pattern.permute.xlu0 0
  %910 = vperm.xlu0 %909, %v900
  %v911 = vpop.permute.xlu0 %910
  %914 = vset.pattern.permute.xlu0 0
  %915 = vperm.xlu0 %914, %v901
  %v916 = vpop.permute.xlu0 %915
  %919 = vset.pattern.permute.xlu0 0
  %920 = vperm.xlu0 %919, %v902
  %v921 = vpop.permute.xlu0 %920
  %v923 = vadd.f32 %v859, %v906
  %v924 = vadd.f32 %v862, %v911
  %v925 = vadd.f32 %v865, %v916
  %v926 = vadd.f32 %v868, %v921
  %v927 = vxor.u32 %v923, 2147483648
  %v928 = vxor.u32 %v924, 2147483648
  %v929 = vxor.u32 %v925, 2147483648
  %v930 = vxor.u32 %v926, 2147483648
  %v931 = vmul.f32 %v927, 1.442695
  %v932 = vpow.pop %v931
  %v933 = vmul.f32 %v928, 1.442695
  %v934 = vpow.pop %v933
  %v935 = vmul.f32 %v929, 1.442695
  %v936 = vpow.pop %v935
  %v937 = vmul.f32 %v930, 1.442695
  %v938 = vpow.pop %v937
  %v939 = vadd.f32 %v932, 1.0
  %v940 = vadd.f32 %v934, 1.0
  %v941 = vadd.f32 %v936, 1.0
  %v942 = vadd.f32 %v938, 1.0
  %v943 = vrcp.pop %v939
  %v944 = vmul.f32 %v939, %v943
  %v945 = vsub.f32 1.0, %v944
  %v946 = vmul.f32 %v943, %v945
  %v947 = vadd.f32 %v943, %v946
  %vm948 = vweird.f32 %v939
  %vm949 = vweird.f32 %v943
  %vm950 = vmor %vm948, %vm949
  %v951 = vsel %vm950, %v943, %v947
  %v952 = vand.u32 2147483647, %v939
  %vm953 = vcmp.eq.f32.partialorder %v952, 8.507059e+37
  %v954 = vand.u32 %v939, 2147483648
  %v955 = vor.u32 1.1754944e-38, %v954
  %v956 = vsel %vm953, %v955, %v951
  %v957 = vmul.f32 1.0, %v956
  %v958 = vrcp.pop %v940
  %v959 = vmul.f32 %v940, %v958
  %v960 = vsub.f32 1.0, %v959
  %v961 = vmul.f32 %v958, %v960
  %v962 = vadd.f32 %v958, %v961
  %vm963 = vweird.f32 %v940
  %vm964 = vweird.f32 %v958
  %vm965 = vmor %vm963, %vm964
  %v966 = vsel %vm965, %v958, %v962
  %v967 = vand.u32 2147483647, %v940
  %vm968 = vcmp.eq.f32.partialorder %v967, 8.507059e+37
  %v969 = vand.u32 %v940, 2147483648
  %v970 = vor.u32 1.1754944e-38, %v969
  %v971 = vsel %vm968, %v970, %v966
  %v972 = vmul.f32 1.0, %v971
  %v973 = vrcp.pop %v941
  %v974 = vmul.f32 %v941, %v973
  %v975 = vsub.f32 1.0, %v974
  %v976 = vmul.f32 %v973, %v975
  %v977 = vadd.f32 %v973, %v976
  %vm978 = vweird.f32 %v941
  %vm979 = vweird.f32 %v973
  %vm980 = vmor %vm978, %vm979
  %v981 = vsel %vm980, %v973, %v977
  %v982 = vand.u32 2147483647, %v941
  %vm983 = vcmp.eq.f32.partialorder %v982, 8.507059e+37
  %v984 = vand.u32 %v941, 2147483648
  %v985 = vor.u32 1.1754944e-38, %v984
  %v986 = vsel %vm983, %v985, %v981
  %v987 = vmul.f32 1.0, %v986
  %v988 = vrcp.pop %v942
  %v989 = vmul.f32 %v942, %v988
  %v990 = vsub.f32 1.0, %v989
  %v991 = vmul.f32 %v988, %v990
  %v992 = vadd.f32 %v988, %v991
  %vm993 = vweird.f32 %v942
  %vm994 = vweird.f32 %v988
  %vm995 = vmor %vm993, %vm994
  %v996 = vsel %vm995, %v988, %v992
  %v997 = vand.u32 2147483647, %v942
  %vm998 = vcmp.eq.f32.partialorder %v997, 8.507059e+37
  %v999 = vand.u32 %v942, 2147483648
  %v1000 = vor.u32 1.1754944e-38, %v999
  %v1001 = vsel %vm998, %v1000, %v996
  %v1002 = vmul.f32 1.0, %v1001
  %v1003 = vsub.f32 1.0, %v957
  %v1004 = vsub.f32 1.0, %v972
  %v1005 = vsub.f32 1.0, %v987
  %v1006 = vsub.f32 1.0, %v1002
  %v1007 = vmul.f32 %v957, %v1003
  %v1008 = vmul.f32 %v972, %v1004
  %v1009 = vmul.f32 %v987, %v1005
  %v1010 = vmul.f32 %v1002, %v1006
  %v1011 = vmul.f32 %v1007, %v888
  %v1012 = vmul.f32 %v1008, %v891
  %v1013 = vmul.f32 %v1009, %v894
  %v1014 = vmul.f32 %v1010, %v897
  %1015 = vst [vmem:[#allocation2] sm:$0xff] %v957
  %1016 = vst [vmem:[#allocation2 + $0x10] sm:$0xff] %v972
  %1017 = vst [vmem:[#allocation2 + $0x20] sm:$0xff] %v987
  %1018 = vst [vmem:[#allocation2 + $0x30] sm:$0xff] %v1002
  %1019 = vst [vmem:[#allocation2 + $0x8] sm:$0xff] %v1011
  %1020 = vst [vmem:[#allocation2 + $0x18] sm:$0xff] %v1012
  %1021 = vst [vmem:[#allocation2 + $0x28] sm:$0xff] %v1013
  %1022 = vst [vmem:[#allocation2 + $0x38] sm:$0xff] %v1014
  %v1023 = vld [vmem:[%s12] sm:$0xff]
  %v1024 = vld [vmem:[%s12 + $0x8] sm:$0xff]
  %v1025 = vld [vmem:[#allocation2] sm:$0xff]
  %v1026 = vld [vmem:[#allocation2 + $0x8] sm:$0xff]
  %v1027 = vld [vmem:[#allocation2 + $0x10] sm:$0xff]
  %v1028 = vld [vmem:[#allocation2 + $0x18] sm:$0xff]
  %v1029 = vld [vmem:[#allocation2 + $0x20] sm:$0xff]
  %v1030 = vld [vmem:[#allocation2 + $0x28] sm:$0xff]
  %v1031 = vld [vmem:[#allocation2 + $0x30] sm:$0xff]
  %v1032 = vld [vmem:[#allocation2 + $0x38] sm:$0xff]
  %v1034 = vsel %vm273, %v1023, 0
  %v1037 = vsel %vm273, %v1024, 0
  %1039 = vmatpush.msra.mxu0 0.0
  %1040 = vmatpush.msra.mxu0 0.0
  %1041 = vmatpush.msra.mxu0 0.0
  %1042 = vmatpush.msra.mxu0 0.0
  %1043 = vmatpush.msra.mxu0 0.0
  %1044 = vmatpush.msra.mxu0 0.0
  %1045 = vmatpush.msra.mxu0 0.0
  %1046 = vmatpush.msra.mxu0 0.0
  %1047 = vmatpush.msra.mxu0 0.0
  %1048 = vmatpush.msra.mxu0 0.0
  %1049 = vmatpush.msra.mxu0 0.0
  %1050 = vmatpush.msra.mxu0 0.0
  %1051 = vmatpush.msra.mxu0 %v1031
  %1052 = vmatpush.msra.mxu0 %v1029
  %1053 = vmatpush.msra.mxu0 %v1027
  %1054 = vmatpush.msra.mxu0 %v1025
  %1055 = vmatmul.f32.gmra.mxu0 %v1034
  %v1056 = vpop.f32.mrf.mxu0
  %v1057 = vadd.f32 0.0, %v1056
  %1058 = vmatmul.f32.gmra.mxu0 %v1037
  %v1059 = vpop.f32.mrf.mxu0
  %v1060 = vadd.f32 0.0, %v1059
  %1061 = vdwg.mxu0
  %1062 = vmatpush.msra.mxu0 0.0
  %1063 = vmatpush.msra.mxu0 0.0
  %1064 = vmatpush.msra.mxu0 0.0
  %1065 = vmatpush.msra.mxu0 0.0
  %1066 = vmatpush.msra.mxu0 0.0
  %1067 = vmatpush.msra.mxu0 0.0
  %1068 = vmatpush.msra.mxu0 0.0
  %1069 = vmatpush.msra.mxu0 0.0
  %1070 = vmatpush.msra.mxu0 0.0
  %1071 = vmatpush.msra.mxu0 0.0
  %1072 = vmatpush.msra.mxu0 0.0
  %1073 = vmatpush.msra.mxu0 0.0
  %1074 = vmatpush.msra.mxu0 %v1032
  %1075 = vmatpush.msra.mxu0 %v1030
  %1076 = vmatpush.msra.mxu0 %v1028
  %1077 = vmatpush.msra.mxu0 %v1026
  %1078 = vmatmul.f32.gmra.mxu0 %v1034
  %v1079 = vpop.f32.mrf.mxu0
  %v1080 = vadd.f32 0.0, %v1079
  %1081 = vmatmul.f32.gmra.mxu0 %v1037
  %v1082 = vpop.f32.mrf.mxu0
  %v1083 = vadd.f32 0.0, %v1082
  %1084 = vdwg.mxu0
  %v1085 = vld [vmem:[%s13] sm:$0xff]
  %v1086 = vld [vmem:[%s13 + $0x8] sm:$0xff]
  %1088 = vset.pattern.permute.xlu0 0
  %1089 = vperm.xlu0 %1088, %v1085
  %v1090 = vpop.permute.xlu0 %1089
  %1093 = vset.pattern.permute.xlu0 0
  %1094 = vperm.xlu0 %1093, %v1086
  %v1095 = vpop.permute.xlu0 %1094
  %v1097 = vadd.f32 %v1057, %v1090
  %v1098 = vadd.f32 %v1060, %v1095
  %1099 = vst [vmem:[%s15 + $0x9] sm:$0xff] %v1097
  %1100 = vst [vmem:[%s15 + $0x11] sm:$0xff] %v1098
  %1101 = vst [vmem:[%s15 + $0x19] sm:$0xff] %v1080
  %1102 = vst [vmem:[%s15 + $0x21] sm:$0xff] %v1083
  // Predicated region
  $region62: #{full_network_forward.1} parent=0 // pred_check
    _
  $region63: #{full_network_forward.1} parent=0 // pred_check_branch
    %1104 = sbr.rel (0) target = $region65
  $region64: #{full_network_forward.1} parent=0 // pred_region
    _
  $region65: #{full_network_forward.1} parent=0 // pred_fallthru
    _
  // Predicated region
  $region66: #{full_network_forward.1} parent=0 // pred_check
    _
  $region67: #{full_network_forward.1} parent=0 // pred_check_branch
    %1106 = sbr.rel (0) target = $region69
  $region68: #{full_network_forward.1} parent=0 // pred_region
    _
  $region69: #{full_network_forward.1} parent=0 // pred_fallthru
    _

</llo_original>
